<compile_context>
chip_gen: v7x
topology: tpu7x:2x2x1
jax: 0.10.0
libtpu: 0.0.40
codegen_flags: <defaults>
</compile_context>

<pallas_src>
import functools

import numpy as np
import jax
import jax.numpy as jnp
from jax import lax
from jax.experimental import pallas as pl
from jax.experimental.pallas import tpu as pltpu

RADIUS = 2
HIDDEN = 16
N_CLASSES = 2          # stand-in for len(data.y.unique())
BN_EPS = 1e-5

_VMEM = pl.BlockSpec(memory_space=pltpu.MemorySpace.VMEM)


# ----------------------------- fused kernel -------------------------------- #
def _lgnn_forward_kernel(adj_g_ref, adj_lg_ref, pmpd_ref, pmpd_t_ref,
                         w_ref, b_ref, wout_ref, bout_ref,
                         out_ref, pack_g_ref, pack_lg_ref,
                         *, radius, hidden, n_layers):
    f32, bf16 = jnp.float32, jnp.bfloat16
    half = hidden // 2

    adj_g = adj_g_ref[...]              # [Nn, Nn] f32 (0/1)
    adj_lg = adj_lg_ref[...]            # [Ne, Ne] f32 (0/1)
    n_nodes, n_edges = adj_g.shape[0], adj_lg.shape[0]

    # MXU operands in bf16 (exact for 0/1/2-valued structure matrices).
    adj_g_b = adj_g.astype(bf16)
    adj_lg_b = adj_lg.astype(bf16)
    pmpd_b = pmpd_ref[...].astype(bf16)       # [Nn, Ne]
    pmpd_t_b = pmpd_t_ref[...].astype(bf16)   # [Ne, Nn]

    # in-degrees = row sums of the dense adjacency (g.in_degrees()), f32.
    deg_g = jnp.sum(adj_g, axis=1, keepdims=True)      # [Nn, 1]
    deg_lg = jnp.sum(adj_lg, axis=1, keepdims=True)    # [Ne, 1]

    # Static helpers, hoisted once per shape.
    col_g = lax.broadcasted_iota(jnp.int32, (n_nodes, hidden), 1)
    col_lg = lax.broadcasted_iota(jnp.int32, (n_edges, hidden), 1)
    keep_g, keep_lg = col_g < half, col_lg < half      # identity half of relu-cat

    # Initial features x = deg (in_feats = 1), zero-padded to `hidden` lanes so
    # every layer uses the same packed contraction width.
    x = jnp.where(col_g == 0, deg_g, 0.0)
    lg_x = jnp.where(col_lg == 0, deg_lg, 0.0)

    # aggregate_radius hop schedule: hop 1, then 2^i extra hops, i=0..radius-2.
    hops = [1] + [2 ** i for i in range(radius - 1)]

    def core(pack_ref, adj_b, feat_a, fuse_in, deg, w_b, bias, keep):
        """One LGNNCore.forward with all 3+radius projections packed into one
        MXU contraction over (3+radius)*hidden."""
        pack_ref[:, 0:hidden] = feat_a
        pack_ref[:, hidden:2 * hidden] = deg * feat_a
        z = feat_a.astype(bf16)
        off = 2 * hidden
        for r in range(radius):
            for _ in range(hops[r]):
                z = jnp.dot(adj_b, z, preferred_element_type=f32).astype(bf16)
            pack_ref[:, off:off + hidden] = z.astype(f32)
            off += hidden
        pack_ref[:, off:off + hidden] = fuse_in

        proj = jnp.dot(pack_ref[...].astype(bf16), w_b,
                       preferred_element_type=f32) + bias

        # torch.cat([res[:, :h/2], relu(res[:, h/2:])], 1): halves keep position.
        res = jnp.where(keep, proj, jnp.maximum(proj, 0.0))

        # BatchNorm1d training-mode forward (batch stats, gamma=1, beta=0).
        # TODO(synk): running_mean / running_var state updates not materialized.
        mean = jnp.mean(res, axis=0, keepdims=True)
        var = jnp.mean((res - mean) ** 2, axis=0, keepdims=True)
        return (res - mean) * lax.rsqrt(var + BN_EPS)

    # TODO(synk): on v7x the two independent g/lg cores per layer could be split
    # across the two TensorCores (pl.core_map); single-TC path kept for v5e/v6e.
    for layer in range(n_layers):
        fuse_g = jnp.dot(pmpd_b, lg_x.astype(bf16), preferred_element_type=f32)
        fuse_lg = jnp.dot(pmpd_t_b, x.astype(bf16), preferred_element_type=f32)
        new_x = core(pack_g_ref, adj_g_b, x, fuse_g, deg_g,
                     w_ref[layer, 0], b_ref[layer, 0], keep_g)
        new_lg = core(pack_lg_ref, adj_lg_b, lg_x, fuse_lg, deg_lg,
                      w_ref[layer, 1], b_ref[layer, 1], keep_lg)
        x, lg_x = new_x, new_lg

    # Final Linear(hidden -> n_classes): the only HBM store of the forward.
    out_ref[...] = (jnp.dot(x.astype(bf16), wout_ref[...],
                            preferred_element_type=f32) + bout_ref[...])


# ----------------------------- wrapper -------------------------------------- #
def lgnn_forward(adj_g, adj_lg, pmpd, pmpd_t, params, *, radius=RADIUS):
    n_nodes = adj_g.shape[0]
    n_edges = adj_lg.shape[0]
    pack_w = (3 + radius) * HIDDEN
    n_layers = params["w_packed"].shape[0]
    kernel = functools.partial(_lgnn_forward_kernel, radius=radius,
                               hidden=HIDDEN, n_layers=n_layers)
    return pl.pallas_call(
        kernel,
        out_shape=jax.ShapeDtypeStruct((n_nodes, N_CLASSES), jnp.float32),
        in_specs=[_VMEM] * 8,
        out_specs=_VMEM,
        scratch_shapes=[pltpu.VMEM((n_nodes, pack_w), jnp.float32),
                        pltpu.VMEM((n_edges, pack_w), jnp.float32)],
    )(adj_g, adj_lg, pmpd, pmpd_t,
      params["w_packed"], params["b_packed"], params["w_out"], params["b_out"])


# ----------------------------- param init ----------------------------------- #
def _init_linear(key, fan_in, fan_out):
    kw, kb = jax.random.split(key)
    bound = 1.0 / np.sqrt(fan_in)
    w = jax.random.uniform(kw, (fan_in, fan_out), jnp.float32, -bound, bound)
    b = jax.random.uniform(kb, (1, fan_out), jnp.float32, -bound, bound)
    return w, b


def _init_core_packed(key, in_feats, hidden, radius):
    """Row-stack [w_prev, w_deg, w_rad_0..r-1, w_fuse]; pre-sum the biases."""
    keys = jax.random.split(key, 3 + radius)
    w_prev, b_prev = _init_linear(keys[0], in_feats, hidden)
    w_deg, b_deg = _init_linear(keys[1], in_feats, hidden)
    w_fuse, b_fuse = _init_linear(keys[2], in_feats, hidden)
    w_rad, b_rad = [], []
    for r in range(radius):
        w, b = _init_linear(keys[3 + r], in_feats, hidden)
        w_rad.append(w)
        b_rad.append(b)
    ws = [w_prev, w_deg] + w_rad + [w_fuse]
    bs = [b_prev, b_deg] + b_rad + [b_fuse]
    if in_feats < hidden:   # layer 1: zero-pad the contraction dim (padded
        ws = [jnp.pad(w, ((0, hidden - in_feats), (0, 0))) for w in ws]
    w_packed = jnp.concatenate(ws, axis=0)     # [(3+radius)*hidden, hidden]
    b_packed = sum(bs)                         # [1, hidden]
    return w_packed, b_packed


def _init_layer_packed(key, in_feats, hidden, radius):
    kg, klg = jax.random.split(key)
    wg, bg = _init_core_packed(kg, in_feats, hidden, radius)
    wlg, blg = _init_core_packed(klg, in_feats, hidden, radius)
    return jnp.stack([wg, wlg]), jnp.stack([bg, blg])   # [2,P*H,H], [2,1,H]


def init_lgnn_params(key, radius):
    k1, k2, k3, k4 = jax.random.split(key, 4)
    layers = [_init_layer_packed(k1, 1, HIDDEN, radius),
              _init_layer_packed(k2, HIDDEN, HIDDEN, radius),
              _init_layer_packed(k3, HIDDEN, HIDDEN, radius)]
    w_out, b_out = _init_linear(k4, HIDDEN, N_CLASSES)
    return {
        "w_packed": jnp.stack([w for w, _ in layers]).astype(jnp.bfloat16),  # [3,2,P*H,H]
        "b_packed": jnp.stack([b for _, b in layers]),                       # [3,2,1,H]
        "w_out": w_out.astype(jnp.bfloat16),                                 # [H, C]
        "b_out": b_out,                                                      # [1, C]
    }


# ----------------------------- main ------------------------------------------ #
if __name__ == "__main__":
    key = jax.random.PRNGKey(0)
    k_src, k_dst, k_params = jax.random.split(key, 3)

    # Synthetic directed graph: 16 nodes, 24 edges (replaces the SMS dataset /
    # DGL graph; graph construction is host-side setup, not kernel work).
    N_NODES, N_EDGES = 16, 24
    src = np.asarray(jax.random.randint(k_src, (N_EDGES,), 0, N_NODES))
    dst = np.asarray(jax.random.randint(k_dst, (N_EDGES,), 0, N_NODES))
    dst = np.where(dst == src, (dst + 1) % N_NODES, dst)   # no self loops

    # Dense adjacency of g (A[dst, src] = 1  <=>  copy_src+sum is A @ z).
    adj_g = np.zeros((N_NODES, N_NODES), np.float32)
    adj_g[dst, src] = 1.0

    # Non-backtracking line graph: edge e1=(u,v) -> e2=(v,w) iff v==src(e2), w!=u.
    adj_lg = np.zeros((N_EDGES, N_EDGES), np.float32)
    for e1 in range(N_EDGES):
        for e2 in range(N_EDGES):
            if e1 != e2 and dst[e1] == src[e2] and dst[e2] != src[e1]:
                adj_lg[e2, e1] = 1.0

    # Incidence-style pm_pd: [num_nodes, num_edges]; transpose is a setup-time
    # constant so no runtime transpose op / extra DMA path exists.
    pm_pd = np.zeros((N_NODES, N_EDGES), np.float32)
    pm_pd[src, np.arange(N_EDGES)] += 1.0
    pm_pd[dst, np.arange(N_EDGES)] += 1.0
    pm_pd_t = np.ascontiguousarray(pm_pd.T)

    adj_g = jnp.asarray(adj_g)
    adj_lg = jnp.asarray(adj_lg)
    pm_pd_j = jnp.asarray(pm_pd)
    pm_pd_t_j = jnp.asarray(pm_pd_t)

    params = init_lgnn_params(k_params, RADIUS)

    out = lgnn_forward(adj_g, adj_lg, pm_pd_j, pm_pd_t_j, params, radius=RADIUS)
    out = jax.block_until_ready(out)
    assert out.shape == (N_NODES, N_CLASSES)
    assert np.all(np.isfinite(np.asarray(out)))
    print("KERNEL_OK")
</pallas_src>

<mosaic_0001>
module attributes {stable_mosaic.version = 11 : i64} {
  func.func @_lgnn_forward_kernel(%arg0: memref<16x16xf32, #tpu.memory_space<vmem>>, %arg1: memref<24x24xf32, #tpu.memory_space<vmem>>, %arg2: memref<16x24xf32, #tpu.memory_space<vmem>>, %arg3: memref<24x16xf32, #tpu.memory_space<vmem>>, %arg4: memref<3x2x80x16xbf16, #tpu.memory_space<vmem>>, %arg5: memref<3x2x1x16xf32, #tpu.memory_space<vmem>>, %arg6: memref<16x2xbf16, #tpu.memory_space<vmem>>, %arg7: memref<1x2xf32, #tpu.memory_space<vmem>>, %arg8: memref<16x2xf32, #tpu.memory_space<vmem>>, %arg9: memref<16x80xf32, #tpu.memory_space<vmem>>, %arg10: memref<24x80xf32, #tpu.memory_space<vmem>>) attributes {dimension_semantics = [], scalar_prefetch = 0 : i64, scratch_operands = 2 : i64, tpu.core_type = #tpu.core_type<tc>} {
    %c0 = arith.constant 0 : index
    %c0_0 = arith.constant 0 : index
    %0 = vector.load %arg0[%c0, %c0_0] : memref<16x16xf32, #tpu.memory_space<vmem>>, vector<16x16xf32>
    %c0_1 = arith.constant 0 : index
    %c0_2 = arith.constant 0 : index
    %1 = vector.load %arg1[%c0_1, %c0_2] : memref<24x24xf32, #tpu.memory_space<vmem>>, vector<24x24xf32>
    %2 = arith.truncf %0 : vector<16x16xf32> to vector<16x16xbf16>
    %3 = arith.truncf %1 : vector<24x24xf32> to vector<24x24xbf16>
    %c0_3 = arith.constant 0 : index
    %c0_4 = arith.constant 0 : index
    %4 = vector.load %arg2[%c0_3, %c0_4] : memref<16x24xf32, #tpu.memory_space<vmem>>, vector<16x24xf32>
    %5 = arith.truncf %4 : vector<16x24xf32> to vector<16x24xbf16>
    %c0_5 = arith.constant 0 : index
    %c0_6 = arith.constant 0 : index
    %6 = vector.load %arg3[%c0_5, %c0_6] : memref<24x16xf32, #tpu.memory_space<vmem>>, vector<24x16xf32>
    %7 = arith.truncf %6 : vector<24x16xf32> to vector<24x16xbf16>
    %cst = arith.constant dense<0.000000e+00> : vector<16xf32>
    %8 = vector.multi_reduction <add>, %0, %cst [1] : vector<16x16xf32> to vector<16xf32>
    %9 = vector.shape_cast %8 : vector<16xf32> to vector<16x1xf32>
    %cst_7 = arith.constant dense<0.000000e+00> : vector<24xf32>
    %10 = vector.multi_reduction <add>, %1, %cst_7 [1] : vector<24x24xf32> to vector<24xf32>
    %11 = vector.shape_cast %10 : vector<24xf32> to vector<24x1xf32>
    %12 = tpu.iota {dimensions = array<i32: 1>} : vector<16x16xi32>
    %13 = tpu.iota {dimensions = array<i32: 1>} : vector<24x16xi32>
    %c8_i32 = arith.constant 8 : i32
    %14 = vector.broadcast %c8_i32 : i32 to vector<16x16xi32>
    %15 = arith.cmpi slt, %12, %14 : vector<16x16xi32>
    %c8_i32_8 = arith.constant 8 : i32
    %16 = vector.broadcast %c8_i32_8 : i32 to vector<24x16xi32>
    %17 = arith.cmpi slt, %13, %16 : vector<24x16xi32>
    %c0_i32 = arith.constant 0 : i32
    %18 = vector.broadcast %c0_i32 : i32 to vector<16x16xi32>
    %19 = arith.cmpi eq, %12, %18 : vector<16x16xi32>
    %cst_9 = arith.constant 0.000000e+00 : f32
    %20 = vector.shape_cast %9 : vector<16x1xf32> to vector<16x1xf32>
    %21 = vector.broadcast %20 : vector<16x1xf32> to vector<16x16xf32>
    %22 = vector.broadcast %cst_9 : f32 to vector<16x16xf32>
    %23 = arith.select %19, %21, %22 : vector<16x16xi1>, vector<16x16xf32>
    %c0_i32_10 = arith.constant 0 : i32
    %24 = vector.broadcast %c0_i32_10 : i32 to vector<24x16xi32>
    %25 = arith.cmpi eq, %13, %24 : vector<24x16xi32>
    %cst_11 = arith.constant 0.000000e+00 : f32
    %26 = vector.shape_cast %11 : vector<24x1xf32> to vector<24x1xf32>
    %27 = vector.broadcast %26 : vector<24x1xf32> to vector<24x16xf32>
    %28 = vector.broadcast %cst_11 : f32 to vector<24x16xf32>
    %29 = arith.select %25, %27, %28 : vector<24x16xi1>, vector<24x16xf32>
    %30 = arith.truncf %29 : vector<24x16xf32> to vector<24x16xbf16>
    %cst_12 = arith.constant dense<0.000000e+00> : vector<16x16xf32>
    %31 = tpu.matmul %5, %30, %cst_12 {dimension_numbers = #tpu.dot_dimension_numbers<[1], [0], [0], [1], [0, 0, 1, 1], [], []>} : vector<16x24xbf16>, vector<24x16xbf16>, vector<16x16xf32> -> vector<16x16xf32>
    %32 = arith.truncf %23 : vector<16x16xf32> to vector<16x16xbf16>
    %cst_13 = arith.constant dense<0.000000e+00> : vector<24x16xf32>
    %33 = tpu.matmul %7, %32, %cst_13 {dimension_numbers = #tpu.dot_dimension_numbers<[1], [0], [0], [1], [0, 0, 1, 1], [], []>} : vector<24x16xbf16>, vector<16x16xbf16>, vector<24x16xf32> -> vector<24x16xf32>
    %c0_14 = arith.constant 0 : index
    %c0_15 = arith.constant 0 : index
    %c0_16 = arith.constant 0 : index
    %c0_17 = arith.constant 0 : index
    %34 = vector.load %arg4[%c0_14, %c0_15, %c0_16, %c0_17] : memref<3x2x80x16xbf16, #tpu.memory_space<vmem>>, vector<1x1x80x16xbf16>
    %35 = vector.shape_cast %34 : vector<1x1x80x16xbf16> to vector<80x16xbf16>
    %c0_18 = arith.constant 0 : index
    %c0_19 = arith.constant 0 : index
    %c0_20 = arith.constant 0 : index
    %c0_21 = arith.constant 0 : index
    %36 = vector.load %arg5[%c0_18, %c0_19, %c0_20, %c0_21] : memref<3x2x1x16xf32, #tpu.memory_space<vmem>>, vector<1x1x1x16xf32>
    %37 = vector.shape_cast %36 : vector<1x1x1x16xf32> to vector<1x16xf32>
    %c0_22 = arith.constant 0 : index
    %c0_23 = arith.constant 0 : index
    %38 = vector.load %arg9[%c0_22, %c0_23] : memref<16x80xf32, #tpu.memory_space<vmem>>, vector<16x16xf32>
    tpu.vector_store %arg9[%c0_22, %c0_23], %23 {strides = array<i32>} : memref<16x80xf32, #tpu.memory_space<vmem>>, vector<16x16xf32>,
    %39 = vector.broadcast %9 : vector<16x1xf32> to vector<16x16xf32>
    %40 = arith.mulf %39, %23 : vector<16x16xf32>
    %c0_24 = arith.constant 0 : index
    %c16 = arith.constant 16 : index
    %41 = vector.load %arg9[%c0_24, %c16] : memref<16x80xf32, #tpu.memory_space<vmem>>, vector<16x16xf32>
    tpu.vector_store %arg9[%c0_24, %c16], %40 {strides = array<i32>} : memref<16x80xf32, #tpu.memory_space<vmem>>, vector<16x16xf32>,
    %42 = arith.truncf %23 : vector<16x16xf32> to vector<16x16xbf16>
    %cst_25 = arith.constant dense<0.000000e+00> : vector<16x16xf32>
    %43 = tpu.matmul %2, %42, %cst_25 {dimension_numbers = #tpu.dot_dimension_numbers<[1], [0], [0], [1], [0, 0, 1, 1], [], []>} : vector<16x16xbf16>, vector<16x16xbf16>, vector<16x16xf32> -> vector<16x16xf32>
    %44 = arith.truncf %43 : vector<16x16xf32> to vector<16x16xbf16>
    %45 = arith.extf %44 : vector<16x16xbf16> to vector<16x16xf32>
    %c0_26 = arith.constant 0 : index
    %c32 = arith.constant 32 : index
    %46 = vector.load %arg9[%c0_26, %c32] : memref<16x80xf32, #tpu.memory_space<vmem>>, vector<16x16xf32>
    tpu.vector_store %arg9[%c0_26, %c32], %45 {strides = array<i32>} : memref<16x80xf32, #tpu.memory_space<vmem>>, vector<16x16xf32>,
    %cst_27 = arith.constant dense<0.000000e+00> : vector<16x16xf32>
    %47 = tpu.matmul %2, %44, %cst_27 {dimension_numbers = #tpu.dot_dimension_numbers<[1], [0], [0], [1], [0, 0, 1, 1], [], []>} : vector<16x16xbf16>, vector<16x16xbf16>, vector<16x16xf32> -> vector<16x16xf32>
    %48 = arith.truncf %47 : vector<16x16xf32> to vector<16x16xbf16>
    %49 = arith.extf %48 : vector<16x16xbf16> to vector<16x16xf32>
    %c0_28 = arith.constant 0 : index
    %c48 = arith.constant 48 : index
    %50 = vector.load %arg9[%c0_28, %c48] : memref<16x80xf32, #tpu.memory_space<vmem>>, vector<16x16xf32>
    tpu.vector_store %arg9[%c0_28, %c48], %49 {strides = array<i32>} : memref<16x80xf32, #tpu.memory_space<vmem>>, vector<16x16xf32>,
    %c0_29 = arith.constant 0 : index
    %c64 = arith.constant 64 : index
    %51 = vector.load %arg9[%c0_29, %c64] : memref<16x80xf32, #tpu.memory_space<vmem>>, vector<16x16xf32>
    tpu.vector_store %arg9[%c0_29, %c64], %31 {strides = array<i32>} : memref<16x80xf32, #tpu.memory_space<vmem>>, vector<16x16xf32>,
    %c0_30 = arith.constant 0 : index
    %c0_31 = arith.constant 0 : index
    %52 = vector.load %arg9[%c0_30, %c0_31] : memref<16x80xf32, #tpu.memory_space<vmem>>, vector<16x80xf32>
    %53 = arith.truncf %52 : vector<16x80xf32> to vector<16x80xbf16>
    %cst_32 = arith.constant dense<0.000000e+00> : vector<16x16xf32>
    %54 = tpu.matmul %53, %35, %cst_32 {dimension_numbers = #tpu.dot_dimension_numbers<[1], [0], [0], [1], [0, 0, 1, 1], [], []>} : vector<16x80xbf16>, vector<80x16xbf16>, vector<16x16xf32> -> vector<16x16xf32>
    %55 = vector.broadcast %37 : vector<1x16xf32> to vector<16x16xf32>
    %56 = arith.addf %54, %55 : vector<16x16xf32>
    %cst_33 = arith.constant 0.000000e+00 : f32
    %57 = vector.broadcast %cst_33 : f32 to vector<16x16xf32>
    %58 = arith.maximumf %56, %57 : vector<16x16xf32>
    %59 = arith.select %15, %56, %58 : vector<16x16xi1>, vector<16x16xf32>
    %cst_34 = arith.constant dense<0.000000e+00> : vector<16xf32>
    %60 = vector.multi_reduction <add>, %59, %cst_34 [0] : vector<16x16xf32> to vector<16xf32>
    %61 = vector.shape_cast %60 : vector<16xf32> to vector<1x16xf32>
    %cst_35 = arith.constant 1.600000e+01 : f32
    %62 = vector.broadcast %cst_35 : f32 to vector<1x16xf32>
    %63 = arith.divf %61, %62 : vector<1x16xf32>
    %64 = vector.broadcast %63 : vector<1x16xf32> to vector<16x16xf32>
    %65 = arith.subf %59, %64 : vector<16x16xf32>
    %66 = arith.mulf %65, %65 : vector<16x16xf32>
    %cst_36 = arith.constant dense<0.000000e+00> : vector<16xf32>
    %67 = vector.multi_reduction <add>, %66, %cst_36 [0] : vector<16x16xf32> to vector<16xf32>
    %68 = vector.shape_cast %67 : vector<16xf32> to vector<1x16xf32>
    %cst_37 = arith.constant 1.600000e+01 : f32
    %69 = vector.broadcast %cst_37 : f32 to vector<1x16xf32>
    %70 = arith.divf %68, %69 : vector<1x16xf32>
    %71 = vector.broadcast %63 : vector<1x16xf32> to vector<16x16xf32>
    %72 = arith.subf %59, %71 : vector<16x16xf32>
    %cst_38 = arith.constant 9.99999974E-6 : f32
    %73 = vector.broadcast %cst_38 : f32 to vector<1x16xf32>
    %74 = arith.addf %70, %73 : vector<1x16xf32>
    %75 = math.rsqrt %74 : vector<1x16xf32>
    %76 = vector.broadcast %75 : vector<1x16xf32> to vector<16x16xf32>
    %77 = arith.mulf %72, %76 : vector<16x16xf32>
    %c0_39 = arith.constant 0 : index
    %c1 = arith.constant 1 : index
    %c0_40 = arith.constant 0 : index
    %c0_41 = arith.constant 0 : index
    %78 = vector.load %arg4[%c0_39, %c1, %c0_40, %c0_41] : memref<3x2x80x16xbf16, #tpu.memory_space<vmem>>, vector<1x1x80x16xbf16>
    %79 = vector.shape_cast %78 : vector<1x1x80x16xbf16> to vector<80x16xbf16>
    %c0_42 = arith.constant 0 : index
    %c1_43 = arith.constant 1 : index
    %c0_44 = arith.constant 0 : index
    %c0_45 = arith.constant 0 : index
    %80 = vector.load %arg5[%c0_42, %c1_43, %c0_44, %c0_45] : memref<3x2x1x16xf32, #tpu.memory_space<vmem>>, vector<1x1x1x16xf32>
    %81 = vector.shape_cast %80 : vector<1x1x1x16xf32> to vector<1x16xf32>
    %c0_46 = arith.constant 0 : index
    %c0_47 = arith.constant 0 : index
    %82 = vector.load %arg10[%c0_46, %c0_47] : memref<24x80xf32, #tpu.memory_space<vmem>>, vector<24x16xf32>
    tpu.vector_store %arg10[%c0_46, %c0_47], %29 {strides = array<i32>} : memref<24x80xf32, #tpu.memory_space<vmem>>, vector<24x16xf32>,
    %83 = vector.broadcast %11 : vector<24x1xf32> to vector<24x16xf32>
    %84 = arith.mulf %83, %29 : vector<24x16xf32>
    %c0_48 = arith.constant 0 : index
    %c16_49 = arith.constant 16 : index
    %85 = vector.load %arg10[%c0_48, %c16_49] : memref<24x80xf32, #tpu.memory_space<vmem>>, vector<24x16xf32>
    tpu.vector_store %arg10[%c0_48, %c16_49], %84 {strides = array<i32>} : memref<24x80xf32, #tpu.memory_space<vmem>>, vector<24x16xf32>,
    %86 = arith.truncf %29 : vector<24x16xf32> to vector<24x16xbf16>
    %cst_50 = arith.constant dense<0.000000e+00> : vector<24x16xf32>
    %87 = tpu.matmul %3, %86, %cst_50 {dimension_numbers = #tpu.dot_dimension_numbers<[1], [0], [0], [1], [0, 0, 1, 1], [], []>} : vector<24x24xbf16>, vector<24x16xbf16>, vector<24x16xf32> -> vector<24x16xf32>
    %88 = arith.truncf %87 : vector<24x16xf32> to vector<24x16xbf16>
    %89 = arith.extf %88 : vector<24x16xbf16> to vector<24x16xf32>
    %c0_51 = arith.constant 0 : index
    %c32_52 = arith.constant 32 : index
    %90 = vector.load %arg10[%c0_51, %c32_52] : memref<24x80xf32, #tpu.memory_space<vmem>>, vector<24x16xf32>
    tpu.vector_store %arg10[%c0_51, %c32_52], %89 {strides = array<i32>} : memref<24x80xf32, #tpu.memory_space<vmem>>, vector<24x16xf32>,
    %cst_53 = arith.constant dense<0.000000e+00> : vector<24x16xf32>
    %91 = tpu.matmul %3, %88, %cst_53 {dimension_numbers = #tpu.dot_dimension_numbers<[1], [0], [0], [1], [0, 0, 1, 1], [], []>} : vector<24x24xbf16>, vector<24x16xbf16>, vector<24x16xf32> -> vector<24x16xf32>
    %92 = arith.truncf %91 : vector<24x16xf32> to vector<24x16xbf16>
    %93 = arith.extf %92 : vector<24x16xbf16> to vector<24x16xf32>
    %c0_54 = arith.constant 0 : index
    %c48_55 = arith.constant 48 : index
    %94 = vector.load %arg10[%c0_54, %c48_55] : memref<24x80xf32, #tpu.memory_space<vmem>>, vector<24x16xf32>
    tpu.vector_store %arg10[%c0_54, %c48_55], %93 {strides = array<i32>} : memref<24x80xf32, #tpu.memory_space<vmem>>, vector<24x16xf32>,
    %c0_56 = arith.constant 0 : index
    %c64_57 = arith.constant 64 : index
    %95 = vector.load %arg10[%c0_56, %c64_57] : memref<24x80xf32, #tpu.memory_space<vmem>>, vector<24x16xf32>
    tpu.vector_store %arg10[%c0_56, %c64_57], %33 {strides = array<i32>} : memref<24x80xf32, #tpu.memory_space<vmem>>, vector<24x16xf32>,
    %c0_58 = arith.constant 0 : index
    %c0_59 = arith.constant 0 : index
    %96 = vector.load %arg10[%c0_58, %c0_59] : memref<24x80xf32, #tpu.memory_space<vmem>>, vector<24x80xf32>
    %97 = arith.truncf %96 : vector<24x80xf32> to vector<24x80xbf16>
    %cst_60 = arith.constant dense<0.000000e+00> : vector<24x16xf32>
    %98 = tpu.matmul %97, %79, %cst_60 {dimension_numbers = #tpu.dot_dimension_numbers<[1], [0], [0], [1], [0, 0, 1, 1], [], []>} : vector<24x80xbf16>, vector<80x16xbf16>, vector<24x16xf32> -> vector<24x16xf32>
    %99 = vector.broadcast %81 : vector<1x16xf32> to vector<24x16xf32>
    %100 = arith.addf %98, %99 : vector<24x16xf32>
    %cst_61 = arith.constant 0.000000e+00 : f32
    %101 = vector.broadcast %cst_61 : f32 to vector<24x16xf32>
    %102 = arith.maximumf %100, %101 : vector<24x16xf32>
    %103 = arith.select %17, %100, %102 : vector<24x16xi1>, vector<24x16xf32>
    %cst_62 = arith.constant dense<0.000000e+00> : vector<16xf32>
    %104 = vector.multi_reduction <add>, %103, %cst_62 [0] : vector<24x16xf32> to vector<16xf32>
    %105 = vector.shape_cast %104 : vector<16xf32> to vector<1x16xf32>
    %cst_63 = arith.constant 2.400000e+01 : f32
    %106 = vector.broadcast %cst_63 : f32 to vector<1x16xf32>
    %107 = arith.divf %105, %106 : vector<1x16xf32>
    %108 = vector.broadcast %107 : vector<1x16xf32> to vector<24x16xf32>
    %109 = arith.subf %103, %108 : vector<24x16xf32>
    %110 = arith.mulf %109, %109 : vector<24x16xf32>
    %cst_64 = arith.constant dense<0.000000e+00> : vector<16xf32>
    %111 = vector.multi_reduction <add>, %110, %cst_64 [0] : vector<24x16xf32> to vector<16xf32>
    %112 = vector.shape_cast %111 : vector<16xf32> to vector<1x16xf32>
    %cst_65 = arith.constant 2.400000e+01 : f32
    %113 = vector.broadcast %cst_65 : f32 to vector<1x16xf32>
    %114 = arith.divf %112, %113 : vector<1x16xf32>
    %115 = vector.broadcast %107 : vector<1x16xf32> to vector<24x16xf32>
    %116 = arith.subf %103, %115 : vector<24x16xf32>
    %cst_66 = arith.constant 9.99999974E-6 : f32
    %117 = vector.broadcast %cst_66 : f32 to vector<1x16xf32>
    %118 = arith.addf %114, %117 : vector<1x16xf32>
    %119 = math.rsqrt %118 : vector<1x16xf32>
    %120 = vector.broadcast %119 : vector<1x16xf32> to vector<24x16xf32>
    %121 = arith.mulf %116, %120 : vector<24x16xf32>
    %122 = arith.truncf %121 : vector<24x16xf32> to vector<24x16xbf16>
    %cst_67 = arith.constant dense<0.000000e+00> : vector<16x16xf32>
    %123 = tpu.matmul %5, %122, %cst_67 {dimension_numbers = #tpu.dot_dimension_numbers<[1], [0], [0], [1], [0, 0, 1, 1], [], []>} : vector<16x24xbf16>, vector<24x16xbf16>, vector<16x16xf32> -> vector<16x16xf32>
    %124 = arith.truncf %77 : vector<16x16xf32> to vector<16x16xbf16>
    %cst_68 = arith.constant dense<0.000000e+00> : vector<24x16xf32>
    %125 = tpu.matmul %7, %124, %cst_68 {dimension_numbers = #tpu.dot_dimension_numbers<[1], [0], [0], [1], [0, 0, 1, 1], [], []>} : vector<24x16xbf16>, vector<16x16xbf16>, vector<24x16xf32> -> vector<24x16xf32>
    %c1_69 = arith.constant 1 : index
    %c0_70 = arith.constant 0 : index
    %c0_71 = arith.constant 0 : index
    %c0_72 = arith.constant 0 : index
    %126 = vector.load %arg4[%c1_69, %c0_70, %c0_71, %c0_72] : memref<3x2x80x16xbf16, #tpu.memory_space<vmem>>, vector<1x1x80x16xbf16>
    %127 = vector.shape_cast %126 : vector<1x1x80x16xbf16> to vector<80x16xbf16>
    %c1_73 = arith.constant 1 : index
    %c0_74 = arith.constant 0 : index
    %c0_75 = arith.constant 0 : index
    %c0_76 = arith.constant 0 : index
    %128 = vector.load %arg5[%c1_73, %c0_74, %c0_75, %c0_76] : memref<3x2x1x16xf32, #tpu.memory_space<vmem>>, vector<1x1x1x16xf32>
    %129 = vector.shape_cast %128 : vector<1x1x1x16xf32> to vector<1x16xf32>
    %c0_77 = arith.constant 0 : index
    %c0_78 = arith.constant 0 : index
    %130 = vector.load %arg9[%c0_77, %c0_78] : memref<16x80xf32, #tpu.memory_space<vmem>>, vector<16x16xf32>
    tpu.vector_store %arg9[%c0_77, %c0_78], %77 {strides = array<i32>} : memref<16x80xf32, #tpu.memory_space<vmem>>, vector<16x16xf32>,
    %131 = vector.broadcast %9 : vector<16x1xf32> to vector<16x16xf32>
    %132 = arith.mulf %131, %77 : vector<16x16xf32>
    %c0_79 = arith.constant 0 : index
    %c16_80 = arith.constant 16 : index
    %133 = vector.load %arg9[%c0_79, %c16_80] : memref<16x80xf32, #tpu.memory_space<vmem>>, vector<16x16xf32>
    tpu.vector_store %arg9[%c0_79, %c16_80], %132 {strides = array<i32>} : memref<16x80xf32, #tpu.memory_space<vmem>>, vector<16x16xf32>,
    %134 = arith.truncf %77 : vector<16x16xf32> to vector<16x16xbf16>
    %cst_81 = arith.constant dense<0.000000e+00> : vector<16x16xf32>
    %135 = tpu.matmul %2, %134, %cst_81 {dimension_numbers = #tpu.dot_dimension_numbers<[1], [0], [0], [1], [0, 0, 1, 1], [], []>} : vector<16x16xbf16>, vector<16x16xbf16>, vector<16x16xf32> -> vector<16x16xf32>
    %136 = arith.truncf %135 : vector<16x16xf32> to vector<16x16xbf16>
    %137 = arith.extf %136 : vector<16x16xbf16> to vector<16x16xf32>
    %c0_82 = arith.constant 0 : index
    %c32_83 = arith.constant 32 : index
    %138 = vector.load %arg9[%c0_82, %c32_83] : memref<16x80xf32, #tpu.memory_space<vmem>>, vector<16x16xf32>
    tpu.vector_store %arg9[%c0_82, %c32_83], %137 {strides = array<i32>} : memref<16x80xf32, #tpu.memory_space<vmem>>, vector<16x16xf32>,
    %cst_84 = arith.constant dense<0.000000e+00> : vector<16x16xf32>
    %139 = tpu.matmul %2, %136, %cst_84 {dimension_numbers = #tpu.dot_dimension_numbers<[1], [0], [0], [1], [0, 0, 1, 1], [], []>} : vector<16x16xbf16>, vector<16x16xbf16>, vector<16x16xf32> -> vector<16x16xf32>
    %140 = arith.truncf %139 : vector<16x16xf32> to vector<16x16xbf16>
    %141 = arith.extf %140 : vector<16x16xbf16> to vector<16x16xf32>
    %c0_85 = arith.constant 0 : index
    %c48_86 = arith.constant 48 : index
    %142 = vector.load %arg9[%c0_85, %c48_86] : memref<16x80xf32, #tpu.memory_space<vmem>>, vector<16x16xf32>
    tpu.vector_store %arg9[%c0_85, %c48_86], %141 {strides = array<i32>} : memref<16x80xf32, #tpu.memory_space<vmem>>, vector<16x16xf32>,
    %c0_87 = arith.constant 0 : index
    %c64_88 = arith.constant 64 : index
    %143 = vector.load %arg9[%c0_87, %c64_88] : memref<16x80xf32, #tpu.memory_space<vmem>>, vector<16x16xf32>
    tpu.vector_store %arg9[%c0_87, %c64_88], %123 {strides = array<i32>} : memref<16x80xf32, #tpu.memory_space<vmem>>, vector<16x16xf32>,
    %c0_89 = arith.constant 0 : index
    %c0_90 = arith.constant 0 : index
    %144 = vector.load %arg9[%c0_89, %c0_90] : memref<16x80xf32, #tpu.memory_space<vmem>>, vector<16x80xf32>
    %145 = arith.truncf %144 : vector<16x80xf32> to vector<16x80xbf16>
    %cst_91 = arith.constant dense<0.000000e+00> : vector<16x16xf32>
    %146 = tpu.matmul %145, %127, %cst_91 {dimension_numbers = #tpu.dot_dimension_numbers<[1], [0], [0], [1], [0, 0, 1, 1], [], []>} : vector<16x80xbf16>, vector<80x16xbf16>, vector<16x16xf32> -> vector<16x16xf32>
    %147 = vector.broadcast %129 : vector<1x16xf32> to vector<16x16xf32>
    %148 = arith.addf %146, %147 : vector<16x16xf32>
    %cst_92 = arith.constant 0.000000e+00 : f32
    %149 = vector.broadcast %cst_92 : f32 to vector<16x16xf32>
    %150 = arith.maximumf %148, %149 : vector<16x16xf32>
    %151 = arith.select %15, %148, %150 : vector<16x16xi1>, vector<16x16xf32>
    %cst_93 = arith.constant dense<0.000000e+00> : vector<16xf32>
    %152 = vector.multi_reduction <add>, %151, %cst_93 [0] : vector<16x16xf32> to vector<16xf32>
    %153 = vector.shape_cast %152 : vector<16xf32> to vector<1x16xf32>
    %cst_94 = arith.constant 1.600000e+01 : f32
    %154 = vector.broadcast %cst_94 : f32 to vector<1x16xf32>
    %155 = arith.divf %153, %154 : vector<1x16xf32>
    %156 = vector.broadcast %155 : vector<1x16xf32> to vector<16x16xf32>
    %157 = arith.subf %151, %156 : vector<16x16xf32>
    %158 = arith.mulf %157, %157 : vector<16x16xf32>
    %cst_95 = arith.constant dense<0.000000e+00> : vector<16xf32>
    %159 = vector.multi_reduction <add>, %158, %cst_95 [0] : vector<16x16xf32> to vector<16xf32>
    %160 = vector.shape_cast %159 : vector<16xf32> to vector<1x16xf32>
    %cst_96 = arith.constant 1.600000e+01 : f32
    %161 = vector.broadcast %cst_96 : f32 to vector<1x16xf32>
    %162 = arith.divf %160, %161 : vector<1x16xf32>
    %163 = vector.broadcast %155 : vector<1x16xf32> to vector<16x16xf32>
    %164 = arith.subf %151, %163 : vector<16x16xf32>
    %cst_97 = arith.constant 9.99999974E-6 : f32
    %165 = vector.broadcast %cst_97 : f32 to vector<1x16xf32>
    %166 = arith.addf %162, %165 : vector<1x16xf32>
    %167 = math.rsqrt %166 : vector<1x16xf32>
    %168 = vector.broadcast %167 : vector<1x16xf32> to vector<16x16xf32>
    %169 = arith.mulf %164, %168 : vector<16x16xf32>
    %c1_98 = arith.constant 1 : index
    %c1_99 = arith.constant 1 : index
    %c0_100 = arith.constant 0 : index
    %c0_101 = arith.constant 0 : index
    %170 = vector.load %arg4[%c1_98, %c1_99, %c0_100, %c0_101] : memref<3x2x80x16xbf16, #tpu.memory_space<vmem>>, vector<1x1x80x16xbf16>
    %171 = vector.shape_cast %170 : vector<1x1x80x16xbf16> to vector<80x16xbf16>
    %c1_102 = arith.constant 1 : index
    %c1_103 = arith.constant 1 : index
    %c0_104 = arith.constant 0 : index
    %c0_105 = arith.constant 0 : index
    %172 = vector.load %arg5[%c1_102, %c1_103, %c0_104, %c0_105] : memref<3x2x1x16xf32, #tpu.memory_space<vmem>>, vector<1x1x1x16xf32>
    %173 = vector.shape_cast %172 : vector<1x1x1x16xf32> to vector<1x16xf32>
    %c0_106 = arith.constant 0 : index
    %c0_107 = arith.constant 0 : index
    %174 = vector.load %arg10[%c0_106, %c0_107] : memref<24x80xf32, #tpu.memory_space<vmem>>, vector<24x16xf32>
    tpu.vector_store %arg10[%c0_106, %c0_107], %121 {strides = array<i32>} : memref<24x80xf32, #tpu.memory_space<vmem>>, vector<24x16xf32>,
    %175 = vector.broadcast %11 : vector<24x1xf32> to vector<24x16xf32>
    %176 = arith.mulf %175, %121 : vector<24x16xf32>
    %c0_108 = arith.constant 0 : index
    %c16_109 = arith.constant 16 : index
    %177 = vector.load %arg10[%c0_108, %c16_109] : memref<24x80xf32, #tpu.memory_space<vmem>>, vector<24x16xf32>
    tpu.vector_store %arg10[%c0_108, %c16_109], %176 {strides = array<i32>} : memref<24x80xf32, #tpu.memory_space<vmem>>, vector<24x16xf32>,
    %178 = arith.truncf %121 : vector<24x16xf32> to vector<24x16xbf16>
    %cst_110 = arith.constant dense<0.000000e+00> : vector<24x16xf32>
    %179 = tpu.matmul %3, %178, %cst_110 {dimension_numbers = #tpu.dot_dimension_numbers<[1], [0], [0], [1], [0, 0, 1, 1], [], []>} : vector<24x24xbf16>, vector<24x16xbf16>, vector<24x16xf32> -> vector<24x16xf32>
    %180 = arith.truncf %179 : vector<24x16xf32> to vector<24x16xbf16>
    %181 = arith.extf %180 : vector<24x16xbf16> to vector<24x16xf32>
    %c0_111 = arith.constant 0 : index
    %c32_112 = arith.constant 32 : index
    %182 = vector.load %arg10[%c0_111, %c32_112] : memref<24x80xf32, #tpu.memory_space<vmem>>, vector<24x16xf32>
    tpu.vector_store %arg10[%c0_111, %c32_112], %181 {strides = array<i32>} : memref<24x80xf32, #tpu.memory_space<vmem>>, vector<24x16xf32>,
    %cst_113 = arith.constant dense<0.000000e+00> : vector<24x16xf32>
    %183 = tpu.matmul %3, %180, %cst_113 {dimension_numbers = #tpu.dot_dimension_numbers<[1], [0], [0], [1], [0, 0, 1, 1], [], []>} : vector<24x24xbf16>, vector<24x16xbf16>, vector<24x16xf32> -> vector<24x16xf32>
    %184 = arith.truncf %183 : vector<24x16xf32> to vector<24x16xbf16>
    %185 = arith.extf %184 : vector<24x16xbf16> to vector<24x16xf32>
    %c0_114 = arith.constant 0 : index
    %c48_115 = arith.constant 48 : index
    %186 = vector.load %arg10[%c0_114, %c48_115] : memref<24x80xf32, #tpu.memory_space<vmem>>, vector<24x16xf32>
    tpu.vector_store %arg10[%c0_114, %c48_115], %185 {strides = array<i32>} : memref<24x80xf32, #tpu.memory_space<vmem>>, vector<24x16xf32>,
    %c0_116 = arith.constant 0 : index
    %c64_117 = arith.constant 64 : index
    %187 = vector.load %arg10[%c0_116, %c64_117] : memref<24x80xf32, #tpu.memory_space<vmem>>, vector<24x16xf32>
    tpu.vector_store %arg10[%c0_116, %c64_117], %125 {strides = array<i32>} : memref<24x80xf32, #tpu.memory_space<vmem>>, vector<24x16xf32>,
    %c0_118 = arith.constant 0 : index
    %c0_119 = arith.constant 0 : index
    %188 = vector.load %arg10[%c0_118, %c0_119] : memref<24x80xf32, #tpu.memory_space<vmem>>, vector<24x80xf32>
    %189 = arith.truncf %188 : vector<24x80xf32> to vector<24x80xbf16>
    %cst_120 = arith.constant dense<0.000000e+00> : vector<24x16xf32>
    %190 = tpu.matmul %189, %171, %cst_120 {dimension_numbers = #tpu.dot_dimension_numbers<[1], [0], [0], [1], [0, 0, 1, 1], [], []>} : vector<24x80xbf16>, vector<80x16xbf16>, vector<24x16xf32> -> vector<24x16xf32>
    %191 = vector.broadcast %173 : vector<1x16xf32> to vector<24x16xf32>
    %192 = arith.addf %190, %191 : vector<24x16xf32>
    %cst_121 = arith.constant 0.000000e+00 : f32
    %193 = vector.broadcast %cst_121 : f32 to vector<24x16xf32>
    %194 = arith.maximumf %192, %193 : vector<24x16xf32>
    %195 = arith.select %17, %192, %194 : vector<24x16xi1>, vector<24x16xf32>
    %cst_122 = arith.constant dense<0.000000e+00> : vector<16xf32>
    %196 = vector.multi_reduction <add>, %195, %cst_122 [0] : vector<24x16xf32> to vector<16xf32>
    %197 = vector.shape_cast %196 : vector<16xf32> to vector<1x16xf32>
    %cst_123 = arith.constant 2.400000e+01 : f32
    %198 = vector.broadcast %cst_123 : f32 to vector<1x16xf32>
    %199 = arith.divf %197, %198 : vector<1x16xf32>
    %200 = vector.broadcast %199 : vector<1x16xf32> to vector<24x16xf32>
    %201 = arith.subf %195, %200 : vector<24x16xf32>
    %202 = arith.mulf %201, %201 : vector<24x16xf32>
    %cst_124 = arith.constant dense<0.000000e+00> : vector<16xf32>
    %203 = vector.multi_reduction <add>, %202, %cst_124 [0] : vector<24x16xf32> to vector<16xf32>
    %204 = vector.shape_cast %203 : vector<16xf32> to vector<1x16xf32>
    %cst_125 = arith.constant 2.400000e+01 : f32
    %205 = vector.broadcast %cst_125 : f32 to vector<1x16xf32>
    %206 = arith.divf %204, %205 : vector<1x16xf32>
    %207 = vector.broadcast %199 : vector<1x16xf32> to vector<24x16xf32>
    %208 = arith.subf %195, %207 : vector<24x16xf32>
    %cst_126 = arith.constant 9.99999974E-6 : f32
    %209 = vector.broadcast %cst_126 : f32 to vector<1x16xf32>
    %210 = arith.addf %206, %209 : vector<1x16xf32>
    %211 = math.rsqrt %210 : vector<1x16xf32>
    %212 = vector.broadcast %211 : vector<1x16xf32> to vector<24x16xf32>
    %213 = arith.mulf %208, %212 : vector<24x16xf32>
    %214 = arith.truncf %213 : vector<24x16xf32> to vector<24x16xbf16>
    %cst_127 = arith.constant dense<0.000000e+00> : vector<16x16xf32>
    %215 = tpu.matmul %5, %214, %cst_127 {dimension_numbers = #tpu.dot_dimension_numbers<[1], [0], [0], [1], [0, 0, 1, 1], [], []>} : vector<16x24xbf16>, vector<24x16xbf16>, vector<16x16xf32> -> vector<16x16xf32>
    %216 = arith.truncf %169 : vector<16x16xf32> to vector<16x16xbf16>
    %cst_128 = arith.constant dense<0.000000e+00> : vector<24x16xf32>
    %217 = tpu.matmul %7, %216, %cst_128 {dimension_numbers = #tpu.dot_dimension_numbers<[1], [0], [0], [1], [0, 0, 1, 1], [], []>} : vector<24x16xbf16>, vector<16x16xbf16>, vector<24x16xf32> -> vector<24x16xf32>
    %c2 = arith.constant 2 : index
    %c0_129 = arith.constant 0 : index
    %c0_130 = arith.constant 0 : index
    %c0_131 = arith.constant 0 : index
    %218 = vector.load %arg4[%c2, %c0_129, %c0_130, %c0_131] : memref<3x2x80x16xbf16, #tpu.memory_space<vmem>>, vector<1x1x80x16xbf16>
    %219 = vector.shape_cast %218 : vector<1x1x80x16xbf16> to vector<80x16xbf16>
    %c2_132 = arith.constant 2 : index
    %c0_133 = arith.constant 0 : index
    %c0_134 = arith.constant 0 : index
    %c0_135 = arith.constant 0 : index
    %220 = vector.load %arg5[%c2_132, %c0_133, %c0_134, %c0_135] : memref<3x2x1x16xf32, #tpu.memory_space<vmem>>, vector<1x1x1x16xf32>
    %221 = vector.shape_cast %220 : vector<1x1x1x16xf32> to vector<1x16xf32>
    %c0_136 = arith.constant 0 : index
    %c0_137 = arith.constant 0 : index
    %222 = vector.load %arg9[%c0_136, %c0_137] : memref<16x80xf32, #tpu.memory_space<vmem>>, vector<16x16xf32>
    tpu.vector_store %arg9[%c0_136, %c0_137], %169 {strides = array<i32>} : memref<16x80xf32, #tpu.memory_space<vmem>>, vector<16x16xf32>,
    %223 = vector.broadcast %9 : vector<16x1xf32> to vector<16x16xf32>
    %224 = arith.mulf %223, %169 : vector<16x16xf32>
    %c0_138 = arith.constant 0 : index
    %c16_139 = arith.constant 16 : index
    %225 = vector.load %arg9[%c0_138, %c16_139] : memref<16x80xf32, #tpu.memory_space<vmem>>, vector<16x16xf32>
    tpu.vector_store %arg9[%c0_138, %c16_139], %224 {strides = array<i32>} : memref<16x80xf32, #tpu.memory_space<vmem>>, vector<16x16xf32>,
    %226 = arith.truncf %169 : vector<16x16xf32> to vector<16x16xbf16>
    %cst_140 = arith.constant dense<0.000000e+00> : vector<16x16xf32>
    %227 = tpu.matmul %2, %226, %cst_140 {dimension_numbers = #tpu.dot_dimension_numbers<[1], [0], [0], [1], [0, 0, 1, 1], [], []>} : vector<16x16xbf16>, vector<16x16xbf16>, vector<16x16xf32> -> vector<16x16xf32>
    %228 = arith.truncf %227 : vector<16x16xf32> to vector<16x16xbf16>
    %229 = arith.extf %228 : vector<16x16xbf16> to vector<16x16xf32>
    %c0_141 = arith.constant 0 : index
    %c32_142 = arith.constant 32 : index
    %230 = vector.load %arg9[%c0_141, %c32_142] : memref<16x80xf32, #tpu.memory_space<vmem>>, vector<16x16xf32>
    tpu.vector_store %arg9[%c0_141, %c32_142], %229 {strides = array<i32>} : memref<16x80xf32, #tpu.memory_space<vmem>>, vector<16x16xf32>,
    %cst_143 = arith.constant dense<0.000000e+00> : vector<16x16xf32>
    %231 = tpu.matmul %2, %228, %cst_143 {dimension_numbers = #tpu.dot_dimension_numbers<[1], [0], [0], [1], [0, 0, 1, 1], [], []>} : vector<16x16xbf16>, vector<16x16xbf16>, vector<16x16xf32> -> vector<16x16xf32>
    %232 = arith.truncf %231 : vector<16x16xf32> to vector<16x16xbf16>
    %233 = arith.extf %232 : vector<16x16xbf16> to vector<16x16xf32>
    %c0_144 = arith.constant 0 : index
    %c48_145 = arith.constant 48 : index
    %234 = vector.load %arg9[%c0_144, %c48_145] : memref<16x80xf32, #tpu.memory_space<vmem>>, vector<16x16xf32>
    tpu.vector_store %arg9[%c0_144, %c48_145], %233 {strides = array<i32>} : memref<16x80xf32, #tpu.memory_space<vmem>>, vector<16x16xf32>,
    %c0_146 = arith.constant 0 : index
    %c64_147 = arith.constant 64 : index
    %235 = vector.load %arg9[%c0_146, %c64_147] : memref<16x80xf32, #tpu.memory_space<vmem>>, vector<16x16xf32>
    tpu.vector_store %arg9[%c0_146, %c64_147], %215 {strides = array<i32>} : memref<16x80xf32, #tpu.memory_space<vmem>>, vector<16x16xf32>,
    %c0_148 = arith.constant 0 : index
    %c0_149 = arith.constant 0 : index
    %236 = vector.load %arg9[%c0_148, %c0_149] : memref<16x80xf32, #tpu.memory_space<vmem>>, vector<16x80xf32>
    %237 = arith.truncf %236 : vector<16x80xf32> to vector<16x80xbf16>
    %cst_150 = arith.constant dense<0.000000e+00> : vector<16x16xf32>
    %238 = tpu.matmul %237, %219, %cst_150 {dimension_numbers = #tpu.dot_dimension_numbers<[1], [0], [0], [1], [0, 0, 1, 1], [], []>} : vector<16x80xbf16>, vector<80x16xbf16>, vector<16x16xf32> -> vector<16x16xf32>
    %239 = vector.broadcast %221 : vector<1x16xf32> to vector<16x16xf32>
    %240 = arith.addf %238, %239 : vector<16x16xf32>
    %cst_151 = arith.constant 0.000000e+00 : f32
    %241 = vector.broadcast %cst_151 : f32 to vector<16x16xf32>
    %242 = arith.maximumf %240, %241 : vector<16x16xf32>
    %243 = arith.select %15, %240, %242 : vector<16x16xi1>, vector<16x16xf32>
    %cst_152 = arith.constant dense<0.000000e+00> : vector<16xf32>
    %244 = vector.multi_reduction <add>, %243, %cst_152 [0] : vector<16x16xf32> to vector<16xf32>
    %245 = vector.shape_cast %244 : vector<16xf32> to vector<1x16xf32>
    %cst_153 = arith.constant 1.600000e+01 : f32
    %246 = vector.broadcast %cst_153 : f32 to vector<1x16xf32>
    %247 = arith.divf %245, %246 : vector<1x16xf32>
    %248 = vector.broadcast %247 : vector<1x16xf32> to vector<16x16xf32>
    %249 = arith.subf %243, %248 : vector<16x16xf32>
    %250 = arith.mulf %249, %249 : vector<16x16xf32>
    %cst_154 = arith.constant dense<0.000000e+00> : vector<16xf32>
    %251 = vector.multi_reduction <add>, %250, %cst_154 [0] : vector<16x16xf32> to vector<16xf32>
    %252 = vector.shape_cast %251 : vector<16xf32> to vector<1x16xf32>
    %cst_155 = arith.constant 1.600000e+01 : f32
    %253 = vector.broadcast %cst_155 : f32 to vector<1x16xf32>
    %254 = arith.divf %252, %253 : vector<1x16xf32>
    %255 = vector.broadcast %247 : vector<1x16xf32> to vector<16x16xf32>
    %256 = arith.subf %243, %255 : vector<16x16xf32>
    %cst_156 = arith.constant 9.99999974E-6 : f32
    %257 = vector.broadcast %cst_156 : f32 to vector<1x16xf32>
    %258 = arith.addf %254, %257 : vector<1x16xf32>
    %259 = math.rsqrt %258 : vector<1x16xf32>
    %260 = vector.broadcast %259 : vector<1x16xf32> to vector<16x16xf32>
    %261 = arith.mulf %256, %260 : vector<16x16xf32>
    %c0_157 = arith.constant 0 : index
    %c0_158 = arith.constant 0 : index
    %262 = vector.load %arg10[%c0_157, %c0_158] : memref<24x80xf32, #tpu.memory_space<vmem>>, vector<24x16xf32>
    tpu.vector_store %arg10[%c0_157, %c0_158], %213 {strides = array<i32>} : memref<24x80xf32, #tpu.memory_space<vmem>>, vector<24x16xf32>,
    %263 = vector.broadcast %11 : vector<24x1xf32> to vector<24x16xf32>
    %264 = arith.mulf %263, %213 : vector<24x16xf32>
    %c0_159 = arith.constant 0 : index
    %c16_160 = arith.constant 16 : index
    %265 = vector.load %arg10[%c0_159, %c16_160] : memref<24x80xf32, #tpu.memory_space<vmem>>, vector<24x16xf32>
    tpu.vector_store %arg10[%c0_159, %c16_160], %264 {strides = array<i32>} : memref<24x80xf32, #tpu.memory_space<vmem>>, vector<24x16xf32>,
    %266 = arith.truncf %213 : vector<24x16xf32> to vector<24x16xbf16>
    %cst_161 = arith.constant dense<0.000000e+00> : vector<24x16xf32>
    %267 = tpu.matmul %3, %266, %cst_161 {dimension_numbers = #tpu.dot_dimension_numbers<[1], [0], [0], [1], [0, 0, 1, 1], [], []>} : vector<24x24xbf16>, vector<24x16xbf16>, vector<24x16xf32> -> vector<24x16xf32>
    %268 = arith.truncf %267 : vector<24x16xf32> to vector<24x16xbf16>
    %269 = arith.extf %268 : vector<24x16xbf16> to vector<24x16xf32>
    %c0_162 = arith.constant 0 : index
    %c32_163 = arith.constant 32 : index
    %270 = vector.load %arg10[%c0_162, %c32_163] : memref<24x80xf32, #tpu.memory_space<vmem>>, vector<24x16xf32>
    tpu.vector_store %arg10[%c0_162, %c32_163], %269 {strides = array<i32>} : memref<24x80xf32, #tpu.memory_space<vmem>>, vector<24x16xf32>,
    %cst_164 = arith.constant dense<0.000000e+00> : vector<24x16xf32>
    %271 = tpu.matmul %3, %268, %cst_164 {dimension_numbers = #tpu.dot_dimension_numbers<[1], [0], [0], [1], [0, 0, 1, 1], [], []>} : vector<24x24xbf16>, vector<24x16xbf16>, vector<24x16xf32> -> vector<24x16xf32>
    %272 = arith.truncf %271 : vector<24x16xf32> to vector<24x16xbf16>
    %273 = arith.extf %272 : vector<24x16xbf16> to vector<24x16xf32>
    %c0_165 = arith.constant 0 : index
    %c48_166 = arith.constant 48 : index
    %274 = vector.load %arg10[%c0_165, %c48_166] : memref<24x80xf32, #tpu.memory_space<vmem>>, vector<24x16xf32>
    tpu.vector_store %arg10[%c0_165, %c48_166], %273 {strides = array<i32>} : memref<24x80xf32, #tpu.memory_space<vmem>>, vector<24x16xf32>,
    %c0_167 = arith.constant 0 : index
    %c64_168 = arith.constant 64 : index
    %275 = vector.load %arg10[%c0_167, %c64_168] : memref<24x80xf32, #tpu.memory_space<vmem>>, vector<24x16xf32>
    tpu.vector_store %arg10[%c0_167, %c64_168], %217 {strides = array<i32>} : memref<24x80xf32, #tpu.memory_space<vmem>>, vector<24x16xf32>,
    %276 = arith.truncf %261 : vector<16x16xf32> to vector<16x16xbf16>
    %c0_169 = arith.constant 0 : index
    %c0_170 = arith.constant 0 : index
    %277 = vector.load %arg6[%c0_169, %c0_170] : memref<16x2xbf16, #tpu.memory_space<vmem>>, vector<16x2xbf16>
    %cst_171 = arith.constant dense<0.000000e+00> : vector<16x2xf32>
    %278 = tpu.matmul %276, %277, %cst_171 {dimension_numbers = #tpu.dot_dimension_numbers<[1], [0], [0], [1], [0, 0, 1, 1], [], []>} : vector<16x16xbf16>, vector<16x2xbf16>, vector<16x2xf32> -> vector<16x2xf32>
    %c0_172 = arith.constant 0 : index
    %c0_173 = arith.constant 0 : index
    %279 = vector.load %arg7[%c0_172, %c0_173] : memref<1x2xf32, #tpu.memory_space<vmem>>, vector<1x2xf32>
    %280 = vector.broadcast %279 : vector<1x2xf32> to vector<16x2xf32>
    %281 = arith.addf %278, %280 : vector<16x2xf32>
    %c0_174 = arith.constant 0 : index
    %c0_175 = arith.constant 0 : index
    %282 = vector.load %arg8[%c0_174, %c0_175] : memref<16x2xf32, #tpu.memory_space<vmem>>, vector<16x2xf32>
    tpu.vector_store %arg8[%c0_174, %c0_175], %281 {strides = array<i32>} : memref<16x2xf32, #tpu.memory_space<vmem>>, vector<16x2xf32>,
    return
  }
}

</mosaic_0001>

<llo_original>
// kernel: tpu_custom_call.1
$region0: #{tpu_custom_call.1}
  #allocation0 [shape = 'u32[]', space=smem, size = 0x4, offset = 0x4, fixed_abs, tag = 'smem constant byte address 0x4 - core index']
  #allocation1 [shape = 'u32[144,128]{1,0:T(1,128)}', space=vmem, size = 0x12000, scoped, tag = 'internal scratch']
  #allocation2 [shape = 'f32[16,80]{1,0:T(8,128)}', space=vmem, size = 0x2000, scoped, tag = 'scratch operand']
  #allocation3 [shape = 'f32[24,80]{1,0:T(8,128)}', space=vmem, size = 0x3000, scoped, tag = 'scratch operand']
  %s0 = inlined_call_operand.vmem [shape: f32[16,16], index: 0, kind: input, shape index: {}]
  %s1 = inlined_call_operand.vmem [shape: f32[24,24], index: 1, kind: input, shape index: {}]
  %s2 = inlined_call_operand.vmem [shape: f32[16,24], index: 2, kind: input, shape index: {}]
  %s3 = inlined_call_operand.vmem [shape: f32[24,16], index: 3, kind: input, shape index: {}]
  %s4 = inlined_call_operand.vmem [shape: bf16[3,2,80,16], index: 4, kind: input, shape index: {}]
  %s5 = inlined_call_operand.vmem [shape: f32[3,2,1,16], index: 5, kind: input, shape index: {}]
  %s6 = inlined_call_operand.vmem [shape: bf16[16,2], index: 6, kind: input, shape index: {}]
  %s7 = inlined_call_operand.vmem [shape: f32[1,2], index: 7, kind: input, shape index: {}]
  %s8 = inlined_call_operand.vmem [shape: f32[16,2], index: 8, kind: output, shape index: {}]
  %s9 = sld [smem:[#allocation0]]
  $region42: #{tpu_custom_call.1} parent=0
    _
  %s11 = ssub.s32 1, %s9
  %s12 = scalar_select 0, %s11, %s9
  // Predicated region
  $region2: #{tpu_custom_call.1} parent=0 // pred_check
    _
  $region3: #{tpu_custom_call.1} parent=0 // pred_check_branch
    %14 = sbr.rel (0) target = $region5
  $region4: #{tpu_custom_call.1} parent=0 // pred_region
    _
  $region5: #{tpu_custom_call.1} parent=0 // pred_fallthru
    _
  // Predicated region
  $region6: #{tpu_custom_call.1} parent=0 // pred_check
    _
  $region7: #{tpu_custom_call.1} parent=0 // pred_check_branch
    %16 = sbr.rel (0) target = $region9
  $region8: #{tpu_custom_call.1} parent=0 // pred_region
    _
  $region9: #{tpu_custom_call.1} parent=0 // pred_fallthru
    _
  // Predicated region
  $region10: #{tpu_custom_call.1} parent=0 // pred_check
    _
  $region11: #{tpu_custom_call.1} parent=0 // pred_check_branch
    %18 = sbr.rel (0) target = $region13
  $region12: #{tpu_custom_call.1} parent=0 // pred_region
    _
  $region13: #{tpu_custom_call.1} parent=0 // pred_fallthru
    _
  // Predicated region
  $region14: #{tpu_custom_call.1} parent=0 // pred_check
    _
  $region15: #{tpu_custom_call.1} parent=0 // pred_check_branch
    %20 = sbr.rel (0) target = $region17
  $region16: #{tpu_custom_call.1} parent=0 // pred_region
    _
  $region17: #{tpu_custom_call.1} parent=0 // pred_fallthru
    _
  // Predicated region
  $region18: #{tpu_custom_call.1} parent=0 // pred_check
    _
  $region19: #{tpu_custom_call.1} parent=0 // pred_check_branch
    %22 = sbr.rel (0) target = $region21
  $region20: #{tpu_custom_call.1} parent=0 // pred_region
    _
  $region21: #{tpu_custom_call.1} parent=0 // pred_fallthru
    _
  // Predicated region
  $region22: #{tpu_custom_call.1} parent=0 // pred_check
    _
  $region23: #{tpu_custom_call.1} parent=0 // pred_check_branch
    %24 = sbr.rel (0) target = $region25
  $region24: #{tpu_custom_call.1} parent=0 // pred_region
    _
  $region25: #{tpu_custom_call.1} parent=0 // pred_fallthru
    _
  // Predicated region
  $region26: #{tpu_custom_call.1} parent=0 // pred_check
    _
  $region27: #{tpu_custom_call.1} parent=0 // pred_check_branch
    %26 = sbr.rel (0) target = $region29
  $region28: #{tpu_custom_call.1} parent=0 // pred_region
    _
  $region29: #{tpu_custom_call.1} parent=0 // pred_fallthru
    _
  // Predicated region
  $region30: #{tpu_custom_call.1} parent=0 // pred_check
    _
  $region31: #{tpu_custom_call.1} parent=0 // pred_check_branch
    %28 = sbr.rel (0) target = $region33
  $region32: #{tpu_custom_call.1} parent=0 // pred_region
    _
  $region33: #{tpu_custom_call.1} parent=0 // pred_fallthru
    _
  %v30 = vld [vmem:[%s0] sm:$0xff]
  %v31 = vld [vmem:[%s0 + $0x8] sm:$0xff]
  %v32 = vld [vmem:[%s1] sm:$0xff]
  %v33 = vld [vmem:[%s1 + $0x8] sm:$0xff]
  %v34 = vld [vmem:[%s1 + $0x10] sm:$0xff]
  %v35 = vpack.c.bf16 %v31, %v30
  %v36 = vpack.c.bf16 %v33, %v32
  %v37 = vpack.c.bf16 %v34, %v34
  %v38 = vld [vmem:[%s2] sm:$0xff]
  %v39 = vld [vmem:[%s2 + $0x8] sm:$0xff]
  %v40 = vpack.c.bf16 %v39, %v38
  %v41 = vld [vmem:[%s3] sm:$0xff]
  %v42 = vld [vmem:[%s3 + $0x8] sm:$0xff]
  %v43 = vld [vmem:[%s3 + $0x10] sm:$0xff]
  %v44 = vpack.c.bf16 %v42, %v41
  %v45 = vpack.c.bf16 %v43, %v43
  %vm46 = vcmask 130048
  %v47 = vsel %vm46, %v30, 0.0
  %48 = vadd.xlane.f32.xlu0 %v47
  %v49 = vpop.xlane.xlu0 %48
  %v50 = vsel %vm46, %v31, 0.0
  %51 = vadd.xlane.f32.xlu0 %v50
  %v52 = vpop.xlane.xlu0 %51
  %vm53 = vcmask 195584
  %v54 = vsel %vm53, %v32, 0.0
  %55 = vadd.xlane.f32.xlu0 %v54
  %v56 = vpop.xlane.xlu0 %55
  %v57 = vsel %vm53, %v33, 0.0
  %58 = vadd.xlane.f32.xlu0 %v57
  %v59 = vpop.xlane.xlu0 %58
  %v60 = vsel %vm53, %v34, 0.0
  %61 = vadd.xlane.f32.xlu0 %v60
  %v62 = vpop.xlane.xlu0 %61
  %v63 = vlaneseq
  %v64 = vand.u32 %v63, 127
  %vm65 = vcmp.lt.s32.totalorder %v64, 8
  %vm66 = vcmp.eq.s32.totalorder %v64, 0
  %v67 = vsel %vm66, %v49, 0.0
  %v68 = vsel %vm66, %v52, 0.0
  %v69 = vsel %vm66, %v56, 0.0
  %v70 = vsel %vm66, %v59, 0.0
  %v71 = vsel %vm66, %v62, 0.0
  %v72 = vpack.c.bf16 %v70, %v69
  %v73 = vpack.c.bf16 %v71, %v71
  %v75 = vsel %vm53, %v40, 0
  %vm77 = vcmask 1043456
  %v79 = vsel %vm77, %v73, 0
  %81 = vmatprep.subr.bf16.mxu0 0
  %82 = vmatpush1.bf16.msra.mxu0 %v72
  %83 = vmatprep.subr.bf16.mxu0 0
  %84 = vmatpush1.bf16.msra.mxu0 %v79
  %85 = vmatprep.subr.bf16.mxu0 0
  %86 = vmatpush1.bf16.msra.mxu0 0
  %87 = vmatprep.subr.bf16.mxu0 0
  %88 = vmatpush1.bf16.msra.mxu0 0
  %89 = vmatprep.subr.bf16.mxu0 0
  %90 = vmatpush1.bf16.msra.mxu0 0
  %91 = vmatprep.subr.bf16.mxu0 0
  %92 = vmatpush1.bf16.msra.mxu0 0
  %93 = vmatprep.subr.bf16.mxu0 0
  %94 = vmatpush1.bf16.msra.mxu0 0
  %95 = vmatprep.subr.bf16.mxu0 0
  %96 = vmatpush1.bf16.msra.mxu0 0
  %97 = vmatprep.subr.bf16.mxu0 0
  %98 = vmatpush1.bf16.msra.mxu0 0
  %99 = vmatprep.subr.bf16.mxu0 0
  %100 = vmatpush1.bf16.msra.mxu0 0
  %101 = vmatprep.subr.bf16.mxu0 0
  %102 = vmatpush1.bf16.msra.mxu0 0
  %103 = vmatprep.subr.bf16.mxu0 0
  %104 = vmatpush1.bf16.msra.mxu0 0
  %105 = vmatprep.subr.bf16.mxu0 0
  %106 = vmatpush1.bf16.msra.mxu0 0
  %107 = vmatprep.subr.bf16.mxu0 0
  %108 = vmatpush1.bf16.msra.mxu0 0
  %109 = vmatprep.subr.bf16.mxu0 0
  %110 = vmatpush1.bf16.msra.mxu0 0
  %111 = vmatprep.subr.bf16.mxu0 0
  %112 = vmatpush1.bf16.msra.mxu0 0
  %113 = vmatprep.mubr.bf16.mxu0 0
  %114 = vmatmul.mubr.bf16.gmra.mrb[0].mxu0 %v75
  %v115 = vpop.f32.mrb[0].mxu0
  %v116 = vadd.f32 0.0, %v115
  %v117 = vpop.f32.mrb[0].mxu0
  %v118 = vpop.f32.mrb[0].mxu0
  %v119 = vadd.f32 0.0, %v118
  %v120 = vpop.f32.mrb[0].mxu0
  %121 = vdwg.mxu0
  %v122 = vpack.c.bf16 %v68, %v67
  %v124 = vsel %vm46, %v44, 0
  %v127 = vsel %vm46, %v45, 0
  %129 = vmatprep.subr.bf16.mxu0 0
  %130 = vmatpush1.bf16.msra.mxu0 %v122
  %131 = vmatprep.subr.bf16.mxu0 0
  %132 = vmatpush1.bf16.msra.mxu0 0
  %133 = vmatprep.subr.bf16.mxu0 0
  %134 = vmatpush1.bf16.msra.mxu0 0
  %135 = vmatprep.subr.bf16.mxu0 0
  %136 = vmatpush1.bf16.msra.mxu0 0
  %137 = vmatprep.subr.bf16.mxu0 0
  %138 = vmatpush1.bf16.msra.mxu0 0
  %139 = vmatprep.subr.bf16.mxu0 0
  %140 = vmatpush1.bf16.msra.mxu0 0
  %141 = vmatprep.subr.bf16.mxu0 0
  %142 = vmatpush1.bf16.msra.mxu0 0
  %143 = vmatprep.subr.bf16.mxu0 0
  %144 = vmatpush1.bf16.msra.mxu0 0
  %145 = vmatprep.subr.bf16.mxu0 0
  %146 = vmatpush1.bf16.msra.mxu0 0
  %147 = vmatprep.subr.bf16.mxu0 0
  %148 = vmatpush1.bf16.msra.mxu0 0
  %149 = vmatprep.subr.bf16.mxu0 0
  %150 = vmatpush1.bf16.msra.mxu0 0
  %151 = vmatprep.subr.bf16.mxu0 0
  %152 = vmatpush1.bf16.msra.mxu0 0
  %153 = vmatprep.subr.bf16.mxu0 0
  %154 = vmatpush1.bf16.msra.mxu0 0
  %155 = vmatprep.subr.bf16.mxu0 0
  %156 = vmatpush1.bf16.msra.mxu0 0
  %157 = vmatprep.subr.bf16.mxu0 0
  %158 = vmatpush1.bf16.msra.mxu0 0
  %159 = vmatprep.subr.bf16.mxu0 0
  %160 = vmatpush1.bf16.msra.mxu0 0
  %161 = vmatprep.mubr.bf16.mxu0 0
  %162 = vmatmul.mubr.bf16.gmra.mrb[0].mxu0 %v124
  %v163 = vpop.f32.mrb[0].mxu0
  %v164 = vadd.f32 0.0, %v163
  %v165 = vpop.f32.mrb[0].mxu0
  %v166 = vpop.f32.mrb[0].mxu0
  %v167 = vadd.f32 0.0, %v166
  %v168 = vpop.f32.mrb[0].mxu0
  %169 = vmatprep.mubr.bf16.mxu0 0
  %170 = vmatmul.mubr.bf16.gmra.mrb[0].mxu0 %v127
  %v171 = vpop.f32.mrb[0].mxu0
  %v172 = vadd.f32 0.0, %v171
  %v173 = vpop.f32.mrb[0].mxu0
  %v174 = vpop.f32.mrb[0].mxu0
  %v175 = vpop.f32.mrb[0].mxu0
  %176 = vdwg.mxu0
  %v177 = vld [vmem:[%s4] sm:$0xf]
  %v178 = vld [vmem:[%s4 + $0x4] sm:$0xf]
  %v179 = vld [vmem:[%s4 + $0x8] sm:$0xf]
  %v180 = vld [vmem:[%s4 + $0xc] sm:$0xf]
  %v181 = vld [vmem:[%s4 + $0x10] sm:$0xf]
  %v182 = vld [vmem:[%s4 + $0x14] sm:$0xf]
  %v183 = vld [vmem:[%s4 + $0x18] sm:$0xf]
  %v184 = vld [vmem:[%s4 + $0x1c] sm:$0xf]
  %v185 = vld [vmem:[%s4 + $0x20] sm:$0xf]
  %v186 = vld [vmem:[%s4 + $0x24] sm:$0xf]
  %v187 = vld [vmem:[%s5] sm:$0x1]
  %188 = vst.msk [vmem:[#allocation2] sm:$0xff] %vm46, %v67
  %189 = vst.msk [vmem:[#allocation2 + $0x8] sm:$0xff] %vm46, %v68
  %v190 = vmul.f32 %v49, %v67
  %v191 = vmul.f32 %v52, %v68
  %194 = vrot.lane.b32.xlu0 %v190, 16
  %v195 = vpop.permute.xlu0 %194
  %196 = vrot.lane.b32.xlu0 %v191, 16
  %v197 = vpop.permute.xlu0 %196
  %vm200 = vcmask 261248
  %201 = vst.msk [vmem:[#allocation2] sm:$0xff] %vm200, %v195
  %202 = vst.msk [vmem:[#allocation2 + $0x8] sm:$0xff] %vm200, %v197
  %v204 = vsel %vm46, %v35, 0
  %206 = vmatprep.subr.bf16.mxu0 0
  %207 = vmatpush1.bf16.msra.mxu0 %v122
  %208 = vmatprep.subr.bf16.mxu0 0
  %209 = vmatpush1.bf16.msra.mxu0 0
  %210 = vmatprep.subr.bf16.mxu0 0
  %211 = vmatpush1.bf16.msra.mxu0 0
  %212 = vmatprep.subr.bf16.mxu0 0
  %213 = vmatpush1.bf16.msra.mxu0 0
  %214 = vmatprep.subr.bf16.mxu0 0
  %215 = vmatpush1.bf16.msra.mxu0 0
  %216 = vmatprep.subr.bf16.mxu0 0
  %217 = vmatpush1.bf16.msra.mxu0 0
  %218 = vmatprep.subr.bf16.mxu0 0
  %219 = vmatpush1.bf16.msra.mxu0 0
  %220 = vmatprep.subr.bf16.mxu0 0
  %221 = vmatpush1.bf16.msra.mxu0 0
  %222 = vmatprep.subr.bf16.mxu0 0
  %223 = vmatpush1.bf16.msra.mxu0 0
  %224 = vmatprep.subr.bf16.mxu0 0
  %225 = vmatpush1.bf16.msra.mxu0 0
  %226 = vmatprep.subr.bf16.mxu0 0
  %227 = vmatpush1.bf16.msra.mxu0 0
  %228 = vmatprep.subr.bf16.mxu0 0
  %229 = vmatpush1.bf16.msra.mxu0 0
  %230 = vmatprep.subr.bf16.mxu0 0
  %231 = vmatpush1.bf16.msra.mxu0 0
  %232 = vmatprep.subr.bf16.mxu0 0
  %233 = vmatpush1.bf16.msra.mxu0 0
  %234 = vmatprep.subr.bf16.mxu0 0
  %235 = vmatpush1.bf16.msra.mxu0 0
  %236 = vmatprep.subr.bf16.mxu0 0
  %237 = vmatpush1.bf16.msra.mxu0 0
  %238 = vmatprep.mubr.bf16.mxu0 0
  %239 = vmatmul.mubr.bf16.gmra.mrb[0].mxu0 %v204
  %v240 = vpop.f32.mrb[0].mxu0
  %v241 = vadd.f32 0.0, %v240
  %v242 = vpop.f32.mrb[0].mxu0
  %v243 = vpop.f32.mrb[0].mxu0
  %v244 = vadd.f32 0.0, %v243
  %v245 = vpop.f32.mrb[0].mxu0
  %246 = vdwg.mxu0
  %v247 = vpack.c.bf16 %v244, %v241
  %v248 = vunpack.c.l.bf16 %v247
  %v249 = vunpack.c.h.bf16 %v247
  %252 = vrot.lane.b32.xlu0 %v248, 32
  %v253 = vpop.permute.xlu0 %252
  %254 = vrot.lane.b32.xlu0 %v249, 32
  %v255 = vpop.permute.xlu0 %254
  %vm258 = vcmask 392448
  %259 = vst.msk [vmem:[#allocation2] sm:$0xff] %vm258, %v253
  %260 = vst.msk [vmem:[#allocation2 + $0x8] sm:$0xff] %vm258, %v255
  %261 = vmatprep.subr.bf16.mxu0 0
  %262 = vmatpush1.bf16.msra.mxu0 %v247
  %263 = vmatprep.subr.bf16.mxu0 0
  %264 = vmatpush1.bf16.msra.mxu0 0
  %265 = vmatprep.subr.bf16.mxu0 0
  %266 = vmatpush1.bf16.msra.mxu0 0
  %267 = vmatprep.subr.bf16.mxu0 0
  %268 = vmatpush1.bf16.msra.mxu0 0
  %269 = vmatprep.subr.bf16.mxu0 0
  %270 = vmatpush1.bf16.msra.mxu0 0
  %271 = vmatprep.subr.bf16.mxu0 0
  %272 = vmatpush1.bf16.msra.mxu0 0
  %273 = vmatprep.subr.bf16.mxu0 0
  %274 = vmatpush1.bf16.msra.mxu0 0
  %275 = vmatprep.subr.bf16.mxu0 0
  %276 = vmatpush1.bf16.msra.mxu0 0
  %277 = vmatprep.subr.bf16.mxu0 0
  %278 = vmatpush1.bf16.msra.mxu0 0
  %279 = vmatprep.subr.bf16.mxu0 0
  %280 = vmatpush1.bf16.msra.mxu0 0
  %281 = vmatprep.subr.bf16.mxu0 0
  %282 = vmatpush1.bf16.msra.mxu0 0
  %283 = vmatprep.subr.bf16.mxu0 0
  %284 = vmatpush1.bf16.msra.mxu0 0
  %285 = vmatprep.subr.bf16.mxu0 0
  %286 = vmatpush1.bf16.msra.mxu0 0
  %287 = vmatprep.subr.bf16.mxu0 0
  %288 = vmatpush1.bf16.msra.mxu0 0
  %289 = vmatprep.subr.bf16.mxu0 0
  %290 = vmatpush1.bf16.msra.mxu0 0
  %291 = vmatprep.subr.bf16.mxu0 0
  %292 = vmatpush1.bf16.msra.mxu0 0
  %293 = vmatprep.mubr.bf16.mxu0 0
  %294 = vmatmul.mubr.bf16.gmra.mrb[0].mxu0 %v204
  %v295 = vpop.f32.mrb[0].mxu0
  %v296 = vadd.f32 0.0, %v295
  %v297 = vpop.f32.mrb[0].mxu0
  %v298 = vpop.f32.mrb[0].mxu0
  %v299 = vadd.f32 0.0, %v298
  %v300 = vpop.f32.mrb[0].mxu0
  %301 = vdwg.mxu0
  %v302 = vpack.c.bf16 %v299, %v296
  %v303 = vunpack.c.l.bf16 %v302
  %v304 = vunpack.c.h.bf16 %v302
  %307 = vrot.lane.b32.xlu0 %v303, 48
  %v308 = vpop.permute.xlu0 %307
  %309 = vrot.lane.b32.xlu0 %v304, 48
  %v310 = vpop.permute.xlu0 %309
  %vm313 = vcmask 523648
  %314 = vst.msk [vmem:[#allocation2] sm:$0xff] %vm313, %v308
  %315 = vst.msk [vmem:[#allocation2 + $0x8] sm:$0xff] %vm313, %v310
  %318 = vrot.lane.b32.xlu0 %v116, 64
  %v319 = vpop.permute.xlu0 %318
  %320 = vrot.lane.b32.xlu0 %v119, 64
  %v321 = vpop.permute.xlu0 %320
  %vm324 = vcmask 654848
  %325 = vst.msk [vmem:[#allocation2] sm:$0xff] %vm324, %v319
  %326 = vst.msk [vmem:[#allocation2 + $0x8] sm:$0xff] %vm324, %v321
  %v327 = vld [vmem:[#allocation2] sm:$0xff]
  %v328 = vld [vmem:[#allocation2 + $0x8] sm:$0xff]
  %v329 = vpack.c.bf16 %v328, %v327
  %v331 = vlaneseq
  %v332 = vshrl.u32 %v331, 7
  %v333 = vsub.s32 0, %v332
  %v334 = vrot.slane %v187, %v333
  %v346 = vunpack.c.l.b16 %v177
  %v347 = vunpack.c.l.b16 %v178
  %v348 = vunpack.c.l.b16 %v179
  %v349 = vunpack.c.l.b16 %v180
  %v350 = vunpack.c.l.b16 %v181
  %v351 = vunpack.c.l.b16 %v182
  %v352 = vunpack.c.l.b16 %v183
  %v353 = vunpack.c.l.b16 %v184
  %v354 = vunpack.c.l.b16 %v185
  %v355 = vunpack.c.l.b16 %v186
  %v356 = vpack.c.b16 %v347, %v346
  %v357 = vpack.c.b16 %v349, %v348
  %v358 = vpack.c.b16 %v351, %v350
  %v359 = vpack.c.b16 %v353, %v352
  %v360 = vpack.c.b16 %v355, %v354
  %vm366 = vcmask 654336
  %v368 = vsel %vm366, %v329, 0
  %370 = vmatprep.subr.bf16.mxu0 0
  %371 = vmatpush1.bf16.msra.mxu0 %v356
  %372 = vmatprep.subr.bf16.mxu0 0
  %373 = vmatpush1.bf16.msra.mxu0 %v357
  %374 = vmatprep.subr.bf16.mxu0 0
  %375 = vmatpush1.bf16.msra.mxu0 %v358
  %376 = vmatprep.subr.bf16.mxu0 0
  %377 = vmatpush1.bf16.msra.mxu0 %v359
  %378 = vmatprep.subr.bf16.mxu0 0
  %379 = vmatpush1.bf16.msra.mxu0 %v360
  %380 = vmatprep.subr.bf16.mxu0 0
  %381 = vmatpush1.bf16.msra.mxu0 0
  %382 = vmatprep.subr.bf16.mxu0 0
  %383 = vmatpush1.bf16.msra.mxu0 0
  %384 = vmatprep.subr.bf16.mxu0 0
  %385 = vmatpush1.bf16.msra.mxu0 0
  %386 = vmatprep.subr.bf16.mxu0 0
  %387 = vmatpush1.bf16.msra.mxu0 0
  %388 = vmatprep.subr.bf16.mxu0 0
  %389 = vmatpush1.bf16.msra.mxu0 0
  %390 = vmatprep.subr.bf16.mxu0 0
  %391 = vmatpush1.bf16.msra.mxu0 0
  %392 = vmatprep.subr.bf16.mxu0 0
  %393 = vmatpush1.bf16.msra.mxu0 0
  %394 = vmatprep.subr.bf16.mxu0 0
  %395 = vmatpush1.bf16.msra.mxu0 0
  %396 = vmatprep.subr.bf16.mxu0 0
  %397 = vmatpush1.bf16.msra.mxu0 0
  %398 = vmatprep.subr.bf16.mxu0 0
  %399 = vmatpush1.bf16.msra.mxu0 0
  %400 = vmatprep.subr.bf16.mxu0 0
  %401 = vmatpush1.bf16.msra.mxu0 0
  %402 = vmatprep.mubr.bf16.mxu0 0
  %403 = vmatmul.mubr.bf16.gmra.mrb[0].mxu0 %v368
  %v404 = vpop.f32.mrb[0].mxu0
  %v405 = vadd.f32 %v334, %v404
  %v406 = vpop.f32.mrb[0].mxu0
  %v407 = vpop.f32.mrb[0].mxu0
  %v408 = vadd.f32 %v334, %v407
  %v409 = vpop.f32.mrb[0].mxu0
  %410 = vdwg.mxu0
  %v411 = vmax.f32 %v405, 0.0
  %v412 = vmax.f32 %v408, 0.0
  %v413 = vsel %vm65, %v405, %v411
  %v414 = vsel %vm65, %v408, %v412
  %v415 = vsel %vm46, %v413, 0.0
  %v416 = vsel %vm46, %v414, 0.0
  %v417 = vadd.f32 %v415, %v416
  %v418 = vrot.slane %v417, 4
  %v419 = vadd.f32 %v417, %v418
  %v420 = vrot.slane %v419, 2
  %v421 = vadd.f32 %v419, %v420
  %v422 = vrot.slane %v421, 1
  %v423 = vadd.f32 %v421, %v422
  %v424 = vrcp.pop 16.0
  %v425 = vmul.f32 %v423, %v424
  %v426 = vsub.f32 %v413, %v425
  %v427 = vsub.f32 %v414, %v425
  %v428 = vmul.f32 %v426, %v426
  %v429 = vmul.f32 %v427, %v427
  %v430 = vsel %vm46, %v428, 0.0
  %v431 = vsel %vm46, %v429, 0.0
  %v432 = vadd.f32 %v430, %v431
  %v433 = vrot.slane %v432, 4
  %v434 = vadd.f32 %v432, %v433
  %v435 = vrot.slane %v434, 2
  %v436 = vadd.f32 %v434, %v435
  %v437 = vrot.slane %v436, 1
  %v438 = vadd.f32 %v436, %v437
  %v439 = vmul.f32 %v438, %v424
  %v440 = vadd.f32 %v439, 1e-05
  %v441 = vrsqrt.pop %v440
  %v442 = vmul.f32 %v426, %v441
  %v443 = vmul.f32 %v427, %v441
  %s444 = scalar_lea.vmem %s4, 40
  %v445 = vld [vmem:[%s444] sm:$0xf]
  %v446 = vld [vmem:[%s444 + $0x4] sm:$0xf]
  %v447 = vld [vmem:[%s444 + $0x8] sm:$0xf]
  %v448 = vld [vmem:[%s444 + $0xc] sm:$0xf]
  %v449 = vld [vmem:[%s444 + $0x10] sm:$0xf]
  %v450 = vld [vmem:[%s444 + $0x14] sm:$0xf]
  %v451 = vld [vmem:[%s444 + $0x18] sm:$0xf]
  %v452 = vld [vmem:[%s444 + $0x1c] sm:$0xf]
  %v453 = vld [vmem:[%s444 + $0x20] sm:$0xf]
  %v454 = vld [vmem:[%s444 + $0x24] sm:$0xf]
  %s455 = scalar_lea.vmem %s5, 1
  %v456 = vld [vmem:[%s455] sm:$0x1]
  %457 = vst.msk [vmem:[#allocation3] sm:$0xff] %vm46, %v69
  %458 = vst.msk [vmem:[#allocation3 + $0x8] sm:$0xff] %vm46, %v70
  %459 = vst.msk [vmem:[#allocation3 + $0x10] sm:$0xff] %vm46, %v71
  %v460 = vmul.f32 %v56, %v69
  %v461 = vmul.f32 %v59, %v70
  %v462 = vmul.f32 %v62, %v71
  %466 = vrot.lane.b32.xlu0 %v460, 16
  %v467 = vpop.permute.xlu0 %466
  %468 = vrot.lane.b32.xlu0 %v461, 16
  %v469 = vpop.permute.xlu0 %468
  %470 = vrot.lane.b32.xlu0 %v462, 16
  %v471 = vpop.permute.xlu0 %470
  %475 = vst.msk [vmem:[#allocation3] sm:$0xff] %vm200, %v467
  %476 = vst.msk [vmem:[#allocation3 + $0x8] sm:$0xff] %vm200, %v469
  %477 = vst.msk [vmem:[#allocation3 + $0x10] sm:$0xff] %vm200, %v471
  %v479 = vsel %vm53, %v36, 0
  %v482 = vsel %vm53, %v37, 0
  %484 = vmatprep.subr.bf16.mxu0 0
  %485 = vmatpush1.bf16.msra.mxu0 %v72
  %486 = vmatprep.subr.bf16.mxu0 0
  %487 = vmatpush1.bf16.msra.mxu0 %v79
  %488 = vmatprep.subr.bf16.mxu0 0
  %489 = vmatpush1.bf16.msra.mxu0 0
  %490 = vmatprep.subr.bf16.mxu0 0
  %491 = vmatpush1.bf16.msra.mxu0 0
  %492 = vmatprep.subr.bf16.mxu0 0
  %493 = vmatpush1.bf16.msra.mxu0 0
  %494 = vmatprep.subr.bf16.mxu0 0
  %495 = vmatpush1.bf16.msra.mxu0 0
  %496 = vmatprep.subr.bf16.mxu0 0
  %497 = vmatpush1.bf16.msra.mxu0 0
  %498 = vmatprep.subr.bf16.mxu0 0
  %499 = vmatpush1.bf16.msra.mxu0 0
  %500 = vmatprep.subr.bf16.mxu0 0
  %501 = vmatpush1.bf16.msra.mxu0 0
  %502 = vmatprep.subr.bf16.mxu0 0
  %503 = vmatpush1.bf16.msra.mxu0 0
  %504 = vmatprep.subr.bf16.mxu0 0
  %505 = vmatpush1.bf16.msra.mxu0 0
  %506 = vmatprep.subr.bf16.mxu0 0
  %507 = vmatpush1.bf16.msra.mxu0 0
  %508 = vmatprep.subr.bf16.mxu0 0
  %509 = vmatpush1.bf16.msra.mxu0 0
  %510 = vmatprep.subr.bf16.mxu0 0
  %511 = vmatpush1.bf16.msra.mxu0 0
  %512 = vmatprep.subr.bf16.mxu0 0
  %513 = vmatpush1.bf16.msra.mxu0 0
  %514 = vmatprep.subr.bf16.mxu0 0
  %515 = vmatpush1.bf16.msra.mxu0 0
  %516 = vmatprep.mubr.bf16.mxu0 0
  %517 = vmatmul.mubr.bf16.gmra.mrb[0].mxu0 %v479
  %v518 = vpop.f32.mrb[0].mxu0
  %v519 = vadd.f32 0.0, %v518
  %v520 = vpop.f32.mrb[0].mxu0
  %v521 = vpop.f32.mrb[0].mxu0
  %v522 = vadd.f32 0.0, %v521
  %v523 = vpop.f32.mrb[0].mxu0
  %524 = vmatprep.mubr.bf16.mxu0 0
  %525 = vmatmul.mubr.bf16.gmra.mrb[0].mxu0 %v482
  %v526 = vpop.f32.mrb[0].mxu0
  %v527 = vadd.f32 0.0, %v526
  %v528 = vpop.f32.mrb[0].mxu0
  %v529 = vpop.f32.mrb[0].mxu0
  %v530 = vpop.f32.mrb[0].mxu0
  %531 = vdwg.mxu0
  %v532 = vpack.c.bf16 %v522, %v519
  %v533 = vpack.c.bf16 %v527, %v527
  %v534 = vunpack.c.l.bf16 %v532
  %v535 = vunpack.c.h.bf16 %v532
  %v536 = vunpack.c.l.bf16 %v533
  %540 = vrot.lane.b32.xlu0 %v534, 32
  %v541 = vpop.permute.xlu0 %540
  %542 = vrot.lane.b32.xlu0 %v535, 32
  %v543 = vpop.permute.xlu0 %542
  %544 = vrot.lane.b32.xlu0 %v536, 32
  %v545 = vpop.permute.xlu0 %544
  %549 = vst.msk [vmem:[#allocation3] sm:$0xff] %vm258, %v541
  %550 = vst.msk [vmem:[#allocation3 + $0x8] sm:$0xff] %vm258, %v543
  %551 = vst.msk [vmem:[#allocation3 + $0x10] sm:$0xff] %vm258, %v545
  %v553 = vsel %vm77, %v533, 0
  %555 = vmatprep.subr.bf16.mxu0 0
  %556 = vmatpush1.bf16.msra.mxu0 %v532
  %557 = vmatprep.subr.bf16.mxu0 0
  %558 = vmatpush1.bf16.msra.mxu0 %v553
  %559 = vmatprep.subr.bf16.mxu0 0
  %560 = vmatpush1.bf16.msra.mxu0 0
  %561 = vmatprep.subr.bf16.mxu0 0
  %562 = vmatpush1.bf16.msra.mxu0 0
  %563 = vmatprep.subr.bf16.mxu0 0
  %564 = vmatpush1.bf16.msra.mxu0 0
  %565 = vmatprep.subr.bf16.mxu0 0
  %566 = vmatpush1.bf16.msra.mxu0 0
  %567 = vmatprep.subr.bf16.mxu0 0
  %568 = vmatpush1.bf16.msra.mxu0 0
  %569 = vmatprep.subr.bf16.mxu0 0
  %570 = vmatpush1.bf16.msra.mxu0 0
  %571 = vmatprep.subr.bf16.mxu0 0
  %572 = vmatpush1.bf16.msra.mxu0 0
  %573 = vmatprep.subr.bf16.mxu0 0
  %574 = vmatpush1.bf16.msra.mxu0 0
  %575 = vmatprep.subr.bf16.mxu0 0
  %576 = vmatpush1.bf16.msra.mxu0 0
  %577 = vmatprep.subr.bf16.mxu0 0
  %578 = vmatpush1.bf16.msra.mxu0 0
  %579 = vmatprep.subr.bf16.mxu0 0
  %580 = vmatpush1.bf16.msra.mxu0 0
  %581 = vmatprep.subr.bf16.mxu0 0
  %582 = vmatpush1.bf16.msra.mxu0 0
  %583 = vmatprep.subr.bf16.mxu0 0
  %584 = vmatpush1.bf16.msra.mxu0 0
  %585 = vmatprep.subr.bf16.mxu0 0
  %586 = vmatpush1.bf16.msra.mxu0 0
  %587 = vmatprep.mubr.bf16.mxu0 0
  %588 = vmatmul.mubr.bf16.gmra.mrb[0].mxu0 %v479
  %v589 = vpop.f32.mrb[0].mxu0
  %v590 = vadd.f32 0.0, %v589
  %v591 = vpop.f32.mrb[0].mxu0
  %v592 = vpop.f32.mrb[0].mxu0
  %v593 = vadd.f32 0.0, %v592
  %v594 = vpop.f32.mrb[0].mxu0
  %595 = vmatprep.mubr.bf16.mxu0 0
  %596 = vmatmul.mubr.bf16.gmra.mrb[0].mxu0 %v482
  %v597 = vpop.f32.mrb[0].mxu0
  %v598 = vadd.f32 0.0, %v597
  %v599 = vpop.f32.mrb[0].mxu0
  %v600 = vpop.f32.mrb[0].mxu0
  %v601 = vpop.f32.mrb[0].mxu0
  %602 = vdwg.mxu0
  %v603 = vpack.c.bf16 %v593, %v590
  %v604 = vpack.c.bf16 %v598, %v598
  %v605 = vunpack.c.l.bf16 %v603
  %v606 = vunpack.c.h.bf16 %v603
  %v607 = vunpack.c.l.bf16 %v604
  %611 = vrot.lane.b32.xlu0 %v605, 48
  %v612 = vpop.permute.xlu0 %611
  %613 = vrot.lane.b32.xlu0 %v606, 48
  %v614 = vpop.permute.xlu0 %613
  %615 = vrot.lane.b32.xlu0 %v607, 48
  %v616 = vpop.permute.xlu0 %615
  %620 = vst.msk [vmem:[#allocation3] sm:$0xff] %vm313, %v612
  %621 = vst.msk [vmem:[#allocation3 + $0x8] sm:$0xff] %vm313, %v614
  %622 = vst.msk [vmem:[#allocation3 + $0x10] sm:$0xff] %vm313, %v616
  %626 = vrot.lane.b32.xlu0 %v164, 64
  %v627 = vpop.permute.xlu0 %626
  %628 = vrot.lane.b32.xlu0 %v167, 64
  %v629 = vpop.permute.xlu0 %628
  %630 = vrot.lane.b32.xlu0 %v172, 64
  %v631 = vpop.permute.xlu0 %630
  %635 = vst.msk [vmem:[#allocation3] sm:$0xff] %vm324, %v627
  %636 = vst.msk [vmem:[#allocation3 + $0x8] sm:$0xff] %vm324, %v629
  %637 = vst.msk [vmem:[#allocation3 + $0x10] sm:$0xff] %vm324, %v631
  %v638 = vld [vmem:[#allocation3] sm:$0xff]
  %v639 = vld [vmem:[#allocation3 + $0x8] sm:$0xff]
  %v640 = vld [vmem:[#allocation3 + $0x10] sm:$0xff]
  %v641 = vpack.c.bf16 %v639, %v638
  %v642 = vpack.c.bf16 %v640, %v640
  %v644 = vlaneseq
  %v645 = vshrl.u32 %v644, 7
  %v646 = vsub.s32 0, %v645
  %v647 = vrot.slane %v456, %v646
  %v659 = vunpack.c.l.b16 %v445
  %v660 = vunpack.c.l.b16 %v446
  %v661 = vunpack.c.l.b16 %v447
  %v662 = vunpack.c.l.b16 %v448
  %v663 = vunpack.c.l.b16 %v449
  %v664 = vunpack.c.l.b16 %v450
  %v665 = vunpack.c.l.b16 %v451
  %v666 = vunpack.c.l.b16 %v452
  %v667 = vunpack.c.l.b16 %v453
  %v668 = vunpack.c.l.b16 %v454
  %v669 = vpack.c.b16 %v660, %v659
  %v670 = vpack.c.b16 %v662, %v661
  %v671 = vpack.c.b16 %v664, %v663
  %v672 = vpack.c.b16 %v666, %v665
  %v673 = vpack.c.b16 %v668, %v667
  %v680 = vsel %vm366, %v641, 0
  %v683 = vsel %vm366, %v642, 0
  %685 = vmatprep.subr.bf16.mxu0 0
  %686 = vmatpush1.bf16.msra.mxu0 %v669
  %687 = vmatprep.subr.bf16.mxu0 0
  %688 = vmatpush1.bf16.msra.mxu0 %v670
  %689 = vmatprep.subr.bf16.mxu0 0
  %690 = vmatpush1.bf16.msra.mxu0 %v671
  %691 = vmatprep.subr.bf16.mxu0 0
  %692 = vmatpush1.bf16.msra.mxu0 %v672
  %693 = vmatprep.subr.bf16.mxu0 0
  %694 = vmatpush1.bf16.msra.mxu0 %v673
  %695 = vmatprep.subr.bf16.mxu0 0
  %696 = vmatpush1.bf16.msra.mxu0 0
  %697 = vmatprep.subr.bf16.mxu0 0
  %698 = vmatpush1.bf16.msra.mxu0 0
  %699 = vmatprep.subr.bf16.mxu0 0
  %700 = vmatpush1.bf16.msra.mxu0 0
  %701 = vmatprep.subr.bf16.mxu0 0
  %702 = vmatpush1.bf16.msra.mxu0 0
  %703 = vmatprep.subr.bf16.mxu0 0
  %704 = vmatpush1.bf16.msra.mxu0 0
  %705 = vmatprep.subr.bf16.mxu0 0
  %706 = vmatpush1.bf16.msra.mxu0 0
  %707 = vmatprep.subr.bf16.mxu0 0
  %708 = vmatpush1.bf16.msra.mxu0 0
  %709 = vmatprep.subr.bf16.mxu0 0
  %710 = vmatpush1.bf16.msra.mxu0 0
  %711 = vmatprep.subr.bf16.mxu0 0
  %712 = vmatpush1.bf16.msra.mxu0 0
  %713 = vmatprep.subr.bf16.mxu0 0
  %714 = vmatpush1.bf16.msra.mxu0 0
  %715 = vmatprep.subr.bf16.mxu0 0
  %716 = vmatpush1.bf16.msra.mxu0 0
  %717 = vmatprep.mubr.bf16.mxu0 0
  %718 = vmatmul.mubr.bf16.gmra.mrb[0].mxu0 %v680
  %v719 = vpop.f32.mrb[0].mxu0
  %v720 = vadd.f32 %v647, %v719
  %v721 = vpop.f32.mrb[0].mxu0
  %v722 = vpop.f32.mrb[0].mxu0
  %v723 = vadd.f32 %v647, %v722
  %v724 = vpop.f32.mrb[0].mxu0
  %725 = vmatprep.mubr.bf16.mxu0 0
  %726 = vmatmul.mubr.bf16.gmra.mrb[0].mxu0 %v683
  %v727 = vpop.f32.mrb[0].mxu0
  %v728 = vadd.f32 %v647, %v727
  %v729 = vpop.f32.mrb[0].mxu0
  %v730 = vpop.f32.mrb[0].mxu0
  %v731 = vpop.f32.mrb[0].mxu0
  %732 = vdwg.mxu0
  %v733 = vmax.f32 %v720, 0.0
  %v734 = vmax.f32 %v723, 0.0
  %v735 = vmax.f32 %v728, 0.0
  %v736 = vsel %vm65, %v720, %v733
  %v737 = vsel %vm65, %v723, %v734
  %v738 = vsel %vm65, %v728, %v735
  %v739 = vsel %vm46, %v736, 0.0
  %v740 = vsel %vm46, %v737, 0.0
  %v741 = vadd.f32 %v739, %v740
  %v742 = vsel %vm46, %v738, 0.0
  %v743 = vadd.f32 %v741, %v742
  %v744 = vrot.slane %v743, 4
  %v745 = vadd.f32 %v743, %v744
  %v746 = vrot.slane %v745, 2
  %v747 = vadd.f32 %v745, %v746
  %v748 = vrot.slane %v747, 1
  %v749 = vadd.f32 %v747, %v748
  %v750 = vrcp.pop 24.0
  %v751 = vmul.f32 %v749, %v750
  %v752 = vsub.f32 %v736, %v751
  %v753 = vsub.f32 %v737, %v751
  %v754 = vsub.f32 %v738, %v751
  %v755 = vmul.f32 %v752, %v752
  %v756 = vmul.f32 %v753, %v753
  %v757 = vmul.f32 %v754, %v754
  %v758 = vsel %vm46, %v755, 0.0
  %v759 = vsel %vm46, %v756, 0.0
  %v760 = vadd.f32 %v758, %v759
  %v761 = vsel %vm46, %v757, 0.0
  %v762 = vadd.f32 %v760, %v761
  %v763 = vrot.slane %v762, 4
  %v764 = vadd.f32 %v762, %v763
  %v765 = vrot.slane %v764, 2
  %v766 = vadd.f32 %v764, %v765
  %v767 = vrot.slane %v766, 1
  %v768 = vadd.f32 %v766, %v767
  %v769 = vmul.f32 %v768, %v750
  %v770 = vadd.f32 %v769, 1e-05
  %v771 = vrsqrt.pop %v770
  %v772 = vmul.f32 %v752, %v771
  %v773 = vmul.f32 %v753, %v771
  %v774 = vmul.f32 %v754, %v771
  %v775 = vpack.c.bf16 %v773, %v772
  %v776 = vpack.c.bf16 %v774, %v774
  %v778 = vsel %vm77, %v776, 0
  %780 = vmatprep.subr.bf16.mxu0 0
  %781 = vmatpush1.bf16.msra.mxu0 %v775
  %782 = vmatprep.subr.bf16.mxu0 0
  %783 = vmatpush1.bf16.msra.mxu0 %v778
  %784 = vmatprep.subr.bf16.mxu0 0
  %785 = vmatpush1.bf16.msra.mxu0 0
  %786 = vmatprep.subr.bf16.mxu0 0
  %787 = vmatpush1.bf16.msra.mxu0 0
  %788 = vmatprep.subr.bf16.mxu0 0
  %789 = vmatpush1.bf16.msra.mxu0 0
  %790 = vmatprep.subr.bf16.mxu0 0
  %791 = vmatpush1.bf16.msra.mxu0 0
  %792 = vmatprep.subr.bf16.mxu0 0
  %793 = vmatpush1.bf16.msra.mxu0 0
  %794 = vmatprep.subr.bf16.mxu0 0
  %795 = vmatpush1.bf16.msra.mxu0 0
  %796 = vmatprep.subr.bf16.mxu0 0
  %797 = vmatpush1.bf16.msra.mxu0 0
  %798 = vmatprep.subr.bf16.mxu0 0
  %799 = vmatpush1.bf16.msra.mxu0 0
  %800 = vmatprep.subr.bf16.mxu0 0
  %801 = vmatpush1.bf16.msra.mxu0 0
  %802 = vmatprep.subr.bf16.mxu0 0
  %803 = vmatpush1.bf16.msra.mxu0 0
  %804 = vmatprep.subr.bf16.mxu0 0
  %805 = vmatpush1.bf16.msra.mxu0 0
  %806 = vmatprep.subr.bf16.mxu0 0
  %807 = vmatpush1.bf16.msra.mxu0 0
  %808 = vmatprep.subr.bf16.mxu0 0
  %809 = vmatpush1.bf16.msra.mxu0 0
  %810 = vmatprep.subr.bf16.mxu0 0
  %811 = vmatpush1.bf16.msra.mxu0 0
  %812 = vmatprep.mubr.bf16.mxu0 0
  %813 = vmatmul.mubr.bf16.gmra.mrb[0].mxu0 %v75
  %v814 = vpop.f32.mrb[0].mxu0
  %v815 = vadd.f32 0.0, %v814
  %v816 = vpop.f32.mrb[0].mxu0
  %v817 = vpop.f32.mrb[0].mxu0
  %v818 = vadd.f32 0.0, %v817
  %v819 = vpop.f32.mrb[0].mxu0
  %820 = vdwg.mxu0
  %v821 = vpack.c.bf16 %v443, %v442
  %822 = vmatprep.subr.bf16.mxu0 0
  %823 = vmatpush1.bf16.msra.mxu0 %v821
  %824 = vmatprep.subr.bf16.mxu0 0
  %825 = vmatpush1.bf16.msra.mxu0 0
  %826 = vmatprep.subr.bf16.mxu0 0
  %827 = vmatpush1.bf16.msra.mxu0 0
  %828 = vmatprep.subr.bf16.mxu0 0
  %829 = vmatpush1.bf16.msra.mxu0 0
  %830 = vmatprep.subr.bf16.mxu0 0
  %831 = vmatpush1.bf16.msra.mxu0 0
  %832 = vmatprep.subr.bf16.mxu0 0
  %833 = vmatpush1.bf16.msra.mxu0 0
  %834 = vmatprep.subr.bf16.mxu0 0
  %835 = vmatpush1.bf16.msra.mxu0 0
  %836 = vmatprep.subr.bf16.mxu0 0
  %837 = vmatpush1.bf16.msra.mxu0 0
  %838 = vmatprep.subr.bf16.mxu0 0
  %839 = vmatpush1.bf16.msra.mxu0 0
  %840 = vmatprep.subr.bf16.mxu0 0
  %841 = vmatpush1.bf16.msra.mxu0 0
  %842 = vmatprep.subr.bf16.mxu0 0
  %843 = vmatpush1.bf16.msra.mxu0 0
  %844 = vmatprep.subr.bf16.mxu0 0
  %845 = vmatpush1.bf16.msra.mxu0 0
  %846 = vmatprep.subr.bf16.mxu0 0
  %847 = vmatpush1.bf16.msra.mxu0 0
  %848 = vmatprep.subr.bf16.mxu0 0
  %849 = vmatpush1.bf16.msra.mxu0 0
  %850 = vmatprep.subr.bf16.mxu0 0
  %851 = vmatpush1.bf16.msra.mxu0 0
  %852 = vmatprep.subr.bf16.mxu0 0
  %853 = vmatpush1.bf16.msra.mxu0 0
  %854 = vmatprep.mubr.bf16.mxu0 0
  %855 = vmatmul.mubr.bf16.gmra.mrb[0].mxu0 %v124
  %v856 = vpop.f32.mrb[0].mxu0
  %v857 = vadd.f32 0.0, %v856
  %v858 = vpop.f32.mrb[0].mxu0
  %v859 = vpop.f32.mrb[0].mxu0
  %v860 = vadd.f32 0.0, %v859
  %v861 = vpop.f32.mrb[0].mxu0
  %862 = vmatprep.mubr.bf16.mxu0 0
  %863 = vmatmul.mubr.bf16.gmra.mrb[0].mxu0 %v127
  %v864 = vpop.f32.mrb[0].mxu0
  %v865 = vadd.f32 0.0, %v864
  %v866 = vpop.f32.mrb[0].mxu0
  %v867 = vpop.f32.mrb[0].mxu0
  %v868 = vpop.f32.mrb[0].mxu0
  %869 = vdwg.mxu0
  %s870 = scalar_lea.vmem %s4, 80
  %v871 = vld [vmem:[%s870] sm:$0xf]
  %v872 = vld [vmem:[%s870 + $0x4] sm:$0xf]
  %v873 = vld [vmem:[%s870 + $0x8] sm:$0xf]
  %v874 = vld [vmem:[%s870 + $0xc] sm:$0xf]
  %v875 = vld [vmem:[%s870 + $0x10] sm:$0xf]
  %v876 = vld [vmem:[%s870 + $0x14] sm:$0xf]
  %v877 = vld [vmem:[%s870 + $0x18] sm:$0xf]
  %v878 = vld [vmem:[%s870 + $0x1c] sm:$0xf]
  %v879 = vld [vmem:[%s870 + $0x20] sm:$0xf]
  %v880 = vld [vmem:[%s870 + $0x24] sm:$0xf]
  %s881 = scalar_lea.vmem %s5, 2
  %v882 = vld [vmem:[%s881] sm:$0x1]
  %883 = vst.msk [vmem:[#allocation2] sm:$0xff] %vm46, %v442
  %884 = vst.msk [vmem:[#allocation2 + $0x8] sm:$0xff] %vm46, %v443
  %v885 = vmul.f32 %v49, %v442
  %v886 = vmul.f32 %v52, %v443
  %889 = vrot.lane.b32.xlu0 %v885, 16
  %v890 = vpop.permute.xlu0 %889
  %891 = vrot.lane.b32.xlu0 %v886, 16
  %v892 = vpop.permute.xlu0 %891
  %895 = vst.msk [vmem:[#allocation2] sm:$0xff] %vm200, %v890
  %896 = vst.msk [vmem:[#allocation2 + $0x8] sm:$0xff] %vm200, %v892
  %897 = vmatprep.subr.bf16.mxu0 0
  %898 = vmatpush1.bf16.msra.mxu0 %v821
  %899 = vmatprep.subr.bf16.mxu0 0
  %900 = vmatpush1.bf16.msra.mxu0 0
  %901 = vmatprep.subr.bf16.mxu0 0
  %902 = vmatpush1.bf16.msra.mxu0 0
  %903 = vmatprep.subr.bf16.mxu0 0
  %904 = vmatpush1.bf16.msra.mxu0 0
  %905 = vmatprep.subr.bf16.mxu0 0
  %906 = vmatpush1.bf16.msra.mxu0 0
  %907 = vmatprep.subr.bf16.mxu0 0
  %908 = vmatpush1.bf16.msra.mxu0 0
  %909 = vmatprep.subr.bf16.mxu0 0
  %910 = vmatpush1.bf16.msra.mxu0 0
  %911 = vmatprep.subr.bf16.mxu0 0
  %912 = vmatpush1.bf16.msra.mxu0 0
  %913 = vmatprep.subr.bf16.mxu0 0
  %914 = vmatpush1.bf16.msra.mxu0 0
  %915 = vmatprep.subr.bf16.mxu0 0
  %916 = vmatpush1.bf16.msra.mxu0 0
  %917 = vmatprep.subr.bf16.mxu0 0
  %918 = vmatpush1.bf16.msra.mxu0 0
  %919 = vmatprep.subr.bf16.mxu0 0
  %920 = vmatpush1.bf16.msra.mxu0 0
  %921 = vmatprep.subr.bf16.mxu0 0
  %922 = vmatpush1.bf16.msra.mxu0 0
  %923 = vmatprep.subr.bf16.mxu0 0
  %924 = vmatpush1.bf16.msra.mxu0 0
  %925 = vmatprep.subr.bf16.mxu0 0
  %926 = vmatpush1.bf16.msra.mxu0 0
  %927 = vmatprep.subr.bf16.mxu0 0
  %928 = vmatpush1.bf16.msra.mxu0 0
  %929 = vmatprep.mubr.bf16.mxu0 0
  %930 = vmatmul.mubr.bf16.gmra.mrb[0].mxu0 %v204
  %v931 = vpop.f32.mrb[0].mxu0
  %v932 = vadd.f32 0.0, %v931
  %v933 = vpop.f32.mrb[0].mxu0
  %v934 = vpop.f32.mrb[0].mxu0
  %v935 = vadd.f32 0.0, %v934
  %v936 = vpop.f32.mrb[0].mxu0
  %937 = vdwg.mxu0
  %v938 = vpack.c.bf16 %v935, %v932
  %v939 = vunpack.c.l.bf16 %v938
  %v940 = vunpack.c.h.bf16 %v938
  %943 = vrot.lane.b32.xlu0 %v939, 32
  %v944 = vpop.permute.xlu0 %943
  %945 = vrot.lane.b32.xlu0 %v940, 32
  %v946 = vpop.permute.xlu0 %945
  %949 = vst.msk [vmem:[#allocation2] sm:$0xff] %vm258, %v944
  %950 = vst.msk [vmem:[#allocation2 + $0x8] sm:$0xff] %vm258, %v946
  %951 = vmatprep.subr.bf16.mxu0 0
  %952 = vmatpush1.bf16.msra.mxu0 %v938
  %953 = vmatprep.subr.bf16.mxu0 0
  %954 = vmatpush1.bf16.msra.mxu0 0
  %955 = vmatprep.subr.bf16.mxu0 0
  %956 = vmatpush1.bf16.msra.mxu0 0
  %957 = vmatprep.subr.bf16.mxu0 0
  %958 = vmatpush1.bf16.msra.mxu0 0
  %959 = vmatprep.subr.bf16.mxu0 0
  %960 = vmatpush1.bf16.msra.mxu0 0
  %961 = vmatprep.subr.bf16.mxu0 0
  %962 = vmatpush1.bf16.msra.mxu0 0
  %963 = vmatprep.subr.bf16.mxu0 0
  %964 = vmatpush1.bf16.msra.mxu0 0
  %965 = vmatprep.subr.bf16.mxu0 0
  %966 = vmatpush1.bf16.msra.mxu0 0
  %967 = vmatprep.subr.bf16.mxu0 0
  %968 = vmatpush1.bf16.msra.mxu0 0
  %969 = vmatprep.subr.bf16.mxu0 0
  %970 = vmatpush1.bf16.msra.mxu0 0
  %971 = vmatprep.subr.bf16.mxu0 0
  %972 = vmatpush1.bf16.msra.mxu0 0
  %973 = vmatprep.subr.bf16.mxu0 0
  %974 = vmatpush1.bf16.msra.mxu0 0
  %975 = vmatprep.subr.bf16.mxu0 0
  %976 = vmatpush1.bf16.msra.mxu0 0
  %977 = vmatprep.subr.bf16.mxu0 0
  %978 = vmatpush1.bf16.msra.mxu0 0
  %979 = vmatprep.subr.bf16.mxu0 0
  %980 = vmatpush1.bf16.msra.mxu0 0
  %981 = vmatprep.subr.bf16.mxu0 0
  %982 = vmatpush1.bf16.msra.mxu0 0
  %983 = vmatprep.mubr.bf16.mxu0 0
  %984 = vmatmul.mubr.bf16.gmra.mrb[0].mxu0 %v204
  %v985 = vpop.f32.mrb[0].mxu0
  %v986 = vadd.f32 0.0, %v985
  %v987 = vpop.f32.mrb[0].mxu0
  %v988 = vpop.f32.mrb[0].mxu0
  %v989 = vadd.f32 0.0, %v988
  %v990 = vpop.f32.mrb[0].mxu0
  %991 = vdwg.mxu0
  %v992 = vpack.c.bf16 %v989, %v986
  %v993 = vunpack.c.l.bf16 %v992
  %v994 = vunpack.c.h.bf16 %v992
  %997 = vrot.lane.b32.xlu0 %v993, 48
  %v998 = vpop.permute.xlu0 %997
  %999 = vrot.lane.b32.xlu0 %v994, 48
  %v1000 = vpop.permute.xlu0 %999
  %1003 = vst.msk [vmem:[#allocation2] sm:$0xff] %vm313, %v998
  %1004 = vst.msk [vmem:[#allocation2 + $0x8] sm:$0xff] %vm313, %v1000
  %1007 = vrot.lane.b32.xlu0 %v815, 64
  %v1008 = vpop.permute.xlu0 %1007
  %1009 = vrot.lane.b32.xlu0 %v818, 64
  %v1010 = vpop.permute.xlu0 %1009
  %1013 = vst.msk [vmem:[#allocation2] sm:$0xff] %vm324, %v1008
  %1014 = vst.msk [vmem:[#allocation2 + $0x8] sm:$0xff] %vm324, %v1010
  %v1015 = vld [vmem:[#allocation2] sm:$0xff]
  %v1016 = vld [vmem:[#allocation2 + $0x8] sm:$0xff]
  %v1017 = vpack.c.bf16 %v1016, %v1015
  %v1019 = vlaneseq
  %v1020 = vshrl.u32 %v1019, 7
  %v1021 = vsub.s32 0, %v1020
  %v1022 = vrot.slane %v882, %v1021
  %v1034 = vunpack.c.l.b16 %v871
  %v1035 = vunpack.c.l.b16 %v872
  %v1036 = vunpack.c.l.b16 %v873
  %v1037 = vunpack.c.l.b16 %v874
  %v1038 = vunpack.c.l.b16 %v875
  %v1039 = vunpack.c.l.b16 %v876
  %v1040 = vunpack.c.l.b16 %v877
  %v1041 = vunpack.c.l.b16 %v878
  %v1042 = vunpack.c.l.b16 %v879
  %v1043 = vunpack.c.l.b16 %v880
  %v1044 = vpack.c.b16 %v1035, %v1034
  %v1045 = vpack.c.b16 %v1037, %v1036
  %v1046 = vpack.c.b16 %v1039, %v1038
  %v1047 = vpack.c.b16 %v1041, %v1040
  %v1048 = vpack.c.b16 %v1043, %v1042
  %v1055 = vsel %vm366, %v1017, 0
  %1057 = vmatprep.subr.bf16.mxu0 0
  %1058 = vmatpush1.bf16.msra.mxu0 %v1044
  %1059 = vmatprep.subr.bf16.mxu0 0
  %1060 = vmatpush1.bf16.msra.mxu0 %v1045
  %1061 = vmatprep.subr.bf16.mxu0 0
  %1062 = vmatpush1.bf16.msra.mxu0 %v1046
  %1063 = vmatprep.subr.bf16.mxu0 0
  %1064 = vmatpush1.bf16.msra.mxu0 %v1047
  %1065 = vmatprep.subr.bf16.mxu0 0
  %1066 = vmatpush1.bf16.msra.mxu0 %v1048
  %1067 = vmatprep.subr.bf16.mxu0 0
  %1068 = vmatpush1.bf16.msra.mxu0 0
  %1069 = vmatprep.subr.bf16.mxu0 0
  %1070 = vmatpush1.bf16.msra.mxu0 0
  %1071 = vmatprep.subr.bf16.mxu0 0
  %1072 = vmatpush1.bf16.msra.mxu0 0
  %1073 = vmatprep.subr.bf16.mxu0 0
  %1074 = vmatpush1.bf16.msra.mxu0 0
  %1075 = vmatprep.subr.bf16.mxu0 0
  %1076 = vmatpush1.bf16.msra.mxu0 0
  %1077 = vmatprep.subr.bf16.mxu0 0
  %1078 = vmatpush1.bf16.msra.mxu0 0
  %1079 = vmatprep.subr.bf16.mxu0 0
  %1080 = vmatpush1.bf16.msra.mxu0 0
  %1081 = vmatprep.subr.bf16.mxu0 0
  %1082 = vmatpush1.bf16.msra.mxu0 0
  %1083 = vmatprep.subr.bf16.mxu0 0
  %1084 = vmatpush1.bf16.msra.mxu0 0
  %1085 = vmatprep.subr.bf16.mxu0 0
  %1086 = vmatpush1.bf16.msra.mxu0 0
  %1087 = vmatprep.subr.bf16.mxu0 0
  %1088 = vmatpush1.bf16.msra.mxu0 0
  %1089 = vmatprep.mubr.bf16.mxu0 0
  %1090 = vmatmul.mubr.bf16.gmra.mrb[0].mxu0 %v1055
  %v1091 = vpop.f32.mrb[0].mxu0
  %v1092 = vadd.f32 %v1022, %v1091
  %v1093 = vpop.f32.mrb[0].mxu0
  %v1094 = vpop.f32.mrb[0].mxu0
  %v1095 = vadd.f32 %v1022, %v1094
  %v1096 = vpop.f32.mrb[0].mxu0
  %1097 = vdwg.mxu0
  %v1098 = vmax.f32 %v1092, 0.0
  %v1099 = vmax.f32 %v1095, 0.0
  %v1100 = vsel %vm65, %v1092, %v1098
  %v1101 = vsel %vm65, %v1095, %v1099
  %v1102 = vsel %vm46, %v1100, 0.0
  %v1103 = vsel %vm46, %v1101, 0.0
  %v1104 = vadd.f32 %v1102, %v1103
  %v1105 = vrot.slane %v1104, 4
  %v1106 = vadd.f32 %v1104, %v1105
  %v1107 = vrot.slane %v1106, 2
  %v1108 = vadd.f32 %v1106, %v1107
  %v1109 = vrot.slane %v1108, 1
  %v1110 = vadd.f32 %v1108, %v1109
  %v1111 = vmul.f32 %v1110, %v424
  %v1112 = vsub.f32 %v1100, %v1111
  %v1113 = vsub.f32 %v1101, %v1111
  %v1114 = vmul.f32 %v1112, %v1112
  %v1115 = vmul.f32 %v1113, %v1113
  %v1116 = vsel %vm46, %v1114, 0.0
  %v1117 = vsel %vm46, %v1115, 0.0
  %v1118 = vadd.f32 %v1116, %v1117
  %v1119 = vrot.slane %v1118, 4
  %v1120 = vadd.f32 %v1118, %v1119
  %v1121 = vrot.slane %v1120, 2
  %v1122 = vadd.f32 %v1120, %v1121
  %v1123 = vrot.slane %v1122, 1
  %v1124 = vadd.f32 %v1122, %v1123
  %v1125 = vmul.f32 %v1124, %v424
  %v1126 = vadd.f32 %v1125, 1e-05
  %v1127 = vrsqrt.pop %v1126
  %v1128 = vmul.f32 %v1112, %v1127
  %v1129 = vmul.f32 %v1113, %v1127
  %s1130 = scalar_lea.vmem %s4, 120
  %v1131 = vld [vmem:[%s1130] sm:$0xf]
  %v1132 = vld [vmem:[%s1130 + $0x4] sm:$0xf]
  %v1133 = vld [vmem:[%s1130 + $0x8] sm:$0xf]
  %v1134 = vld [vmem:[%s1130 + $0xc] sm:$0xf]
  %v1135 = vld [vmem:[%s1130 + $0x10] sm:$0xf]
  %v1136 = vld [vmem:[%s1130 + $0x14] sm:$0xf]
  %v1137 = vld [vmem:[%s1130 + $0x18] sm:$0xf]
  %v1138 = vld [vmem:[%s1130 + $0x1c] sm:$0xf]
  %v1139 = vld [vmem:[%s1130 + $0x20] sm:$0xf]
  %v1140 = vld [vmem:[%s1130 + $0x24] sm:$0xf]
  %s1141 = scalar_lea.vmem %s5, 3
  %v1142 = vld [vmem:[%s1141] sm:$0x1]
  %1143 = vst.msk [vmem:[#allocation3] sm:$0xff] %vm46, %v772
  %1144 = vst.msk [vmem:[#allocation3 + $0x8] sm:$0xff] %vm46, %v773
  %1145 = vst.msk [vmem:[#allocation3 + $0x10] sm:$0xff] %vm46, %v774
  %v1146 = vmul.f32 %v56, %v772
  %v1147 = vmul.f32 %v59, %v773
  %v1148 = vmul.f32 %v62, %v774
  %1152 = vrot.lane.b32.xlu0 %v1146, 16
  %v1153 = vpop.permute.xlu0 %1152
  %1154 = vrot.lane.b32.xlu0 %v1147, 16
  %v1155 = vpop.permute.xlu0 %1154
  %1156 = vrot.lane.b32.xlu0 %v1148, 16
  %v1157 = vpop.permute.xlu0 %1156
  %1161 = vst.msk [vmem:[#allocation3] sm:$0xff] %vm200, %v1153
  %1162 = vst.msk [vmem:[#allocation3 + $0x8] sm:$0xff] %vm200, %v1155
  %1163 = vst.msk [vmem:[#allocation3 + $0x10] sm:$0xff] %vm200, %v1157
  %1164 = vmatprep.subr.bf16.mxu0 0
  %1165 = vmatpush1.bf16.msra.mxu0 %v775
  %1166 = vmatprep.subr.bf16.mxu0 0
  %1167 = vmatpush1.bf16.msra.mxu0 %v778
  %1168 = vmatprep.subr.bf16.mxu0 0
  %1169 = vmatpush1.bf16.msra.mxu0 0
  %1170 = vmatprep.subr.bf16.mxu0 0
  %1171 = vmatpush1.bf16.msra.mxu0 0
  %1172 = vmatprep.subr.bf16.mxu0 0
  %1173 = vmatpush1.bf16.msra.mxu0 0
  %1174 = vmatprep.subr.bf16.mxu0 0
  %1175 = vmatpush1.bf16.msra.mxu0 0
  %1176 = vmatprep.subr.bf16.mxu0 0
  %1177 = vmatpush1.bf16.msra.mxu0 0
  %1178 = vmatprep.subr.bf16.mxu0 0
  %1179 = vmatpush1.bf16.msra.mxu0 0
  %1180 = vmatprep.subr.bf16.mxu0 0
  %1181 = vmatpush1.bf16.msra.mxu0 0
  %1182 = vmatprep.subr.bf16.mxu0 0
  %1183 = vmatpush1.bf16.msra.mxu0 0
  %1184 = vmatprep.subr.bf16.mxu0 0
  %1185 = vmatpush1.bf16.msra.mxu0 0
  %1186 = vmatprep.subr.bf16.mxu0 0
  %1187 = vmatpush1.bf16.msra.mxu0 0
  %1188 = vmatprep.subr.bf16.mxu0 0
  %1189 = vmatpush1.bf16.msra.mxu0 0
  %1190 = vmatprep.subr.bf16.mxu0 0
  %1191 = vmatpush1.bf16.msra.mxu0 0
  %1192 = vmatprep.subr.bf16.mxu0 0
  %1193 = vmatpush1.bf16.msra.mxu0 0
  %1194 = vmatprep.subr.bf16.mxu0 0
  %1195 = vmatpush1.bf16.msra.mxu0 0
  %1196 = vmatprep.mubr.bf16.mxu0 0
  %1197 = vmatmul.mubr.bf16.gmra.mrb[0].mxu0 %v479
  %v1198 = vpop.f32.mrb[0].mxu0
  %v1199 = vadd.f32 0.0, %v1198
  %v1200 = vpop.f32.mrb[0].mxu0
  %v1201 = vpop.f32.mrb[0].mxu0
  %v1202 = vadd.f32 0.0, %v1201
  %v1203 = vpop.f32.mrb[0].mxu0
  %1204 = vmatprep.mubr.bf16.mxu0 0
  %1205 = vmatmul.mubr.bf16.gmra.mrb[0].mxu0 %v482
  %v1206 = vpop.f32.mrb[0].mxu0
  %v1207 = vadd.f32 0.0, %v1206
  %v1208 = vpop.f32.mrb[0].mxu0
  %v1209 = vpop.f32.mrb[0].mxu0
  %v1210 = vpop.f32.mrb[0].mxu0
  %1211 = vdwg.mxu0
  %v1212 = vpack.c.bf16 %v1202, %v1199
  %v1213 = vpack.c.bf16 %v1207, %v1207
  %v1214 = vunpack.c.l.bf16 %v1212
  %v1215 = vunpack.c.h.bf16 %v1212
  %v1216 = vunpack.c.l.bf16 %v1213
  %1220 = vrot.lane.b32.xlu0 %v1214, 32
  %v1221 = vpop.permute.xlu0 %1220
  %1222 = vrot.lane.b32.xlu0 %v1215, 32
  %v1223 = vpop.permute.xlu0 %1222
  %1224 = vrot.lane.b32.xlu0 %v1216, 32
  %v1225 = vpop.permute.xlu0 %1224
  %1229 = vst.msk [vmem:[#allocation3] sm:$0xff] %vm258, %v1221
  %1230 = vst.msk [vmem:[#allocation3 + $0x8] sm:$0xff] %vm258, %v1223
  %1231 = vst.msk [vmem:[#allocation3 + $0x10] sm:$0xff] %vm258, %v1225
  %v1233 = vsel %vm77, %v1213, 0
  %1235 = vmatprep.subr.bf16.mxu0 0
  %1236 = vmatpush1.bf16.msra.mxu0 %v1212
  %1237 = vmatprep.subr.bf16.mxu0 0
  %1238 = vmatpush1.bf16.msra.mxu0 %v1233
  %1239 = vmatprep.subr.bf16.mxu0 0
  %1240 = vmatpush1.bf16.msra.mxu0 0
  %1241 = vmatprep.subr.bf16.mxu0 0
  %1242 = vmatpush1.bf16.msra.mxu0 0
  %1243 = vmatprep.subr.bf16.mxu0 0
  %1244 = vmatpush1.bf16.msra.mxu0 0
  %1245 = vmatprep.subr.bf16.mxu0 0
  %1246 = vmatpush1.bf16.msra.mxu0 0
  %1247 = vmatprep.subr.bf16.mxu0 0
  %1248 = vmatpush1.bf16.msra.mxu0 0
  %1249 = vmatprep.subr.bf16.mxu0 0
  %1250 = vmatpush1.bf16.msra.mxu0 0
  %1251 = vmatprep.subr.bf16.mxu0 0
  %1252 = vmatpush1.bf16.msra.mxu0 0
  %1253 = vmatprep.subr.bf16.mxu0 0
  %1254 = vmatpush1.bf16.msra.mxu0 0
  %1255 = vmatprep.subr.bf16.mxu0 0
  %1256 = vmatpush1.bf16.msra.mxu0 0
  %1257 = vmatprep.subr.bf16.mxu0 0
  %1258 = vmatpush1.bf16.msra.mxu0 0
  %1259 = vmatprep.subr.bf16.mxu0 0
  %1260 = vmatpush1.bf16.msra.mxu0 0
  %1261 = vmatprep.subr.bf16.mxu0 0
  %1262 = vmatpush1.bf16.msra.mxu0 0
  %1263 = vmatprep.subr.bf16.mxu0 0
  %1264 = vmatpush1.bf16.msra.mxu0 0
  %1265 = vmatprep.subr.bf16.mxu0 0
  %1266 = vmatpush1.bf16.msra.mxu0 0
  %1267 = vmatprep.mubr.bf16.mxu0 0
  %1268 = vmatmul.mubr.bf16.gmra.mrb[0].mxu0 %v479
  %v1269 = vpop.f32.mrb[0].mxu0
  %v1270 = vadd.f32 0.0, %v1269
  %v1271 = vpop.f32.mrb[0].mxu0
  %v1272 = vpop.f32.mrb[0].mxu0
  %v1273 = vadd.f32 0.0, %v1272
  %v1274 = vpop.f32.mrb[0].mxu0
  %1275 = vmatprep.mubr.bf16.mxu0 0
  %1276 = vmatmul.mubr.bf16.gmra.mrb[0].mxu0 %v482
  %v1277 = vpop.f32.mrb[0].mxu0
  %v1278 = vadd.f32 0.0, %v1277
  %v1279 = vpop.f32.mrb[0].mxu0
  %v1280 = vpop.f32.mrb[0].mxu0
  %v1281 = vpop.f32.mrb[0].mxu0
  %1282 = vdwg.mxu0
  %v1283 = vpack.c.bf16 %v1273, %v1270
  %v1284 = vpack.c.bf16 %v1278, %v1278
  %v1285 = vunpack.c.l.bf16 %v1283
  %v1286 = vunpack.c.h.bf16 %v1283
  %v1287 = vunpack.c.l.bf16 %v1284
  %1291 = vrot.lane.b32.xlu0 %v1285, 48
  %v1292 = vpop.permute.xlu0 %1291
  %1293 = vrot.lane.b32.xlu0 %v1286, 48
  %v1294 = vpop.permute.xlu0 %1293
  %1295 = vrot.lane.b32.xlu0 %v1287, 48
  %v1296 = vpop.permute.xlu0 %1295
  %1300 = vst.msk [vmem:[#allocation3] sm:$0xff] %vm313, %v1292
  %1301 = vst.msk [vmem:[#allocation3 + $0x8] sm:$0xff] %vm313, %v1294
  %1302 = vst.msk [vmem:[#allocation3 + $0x10] sm:$0xff] %vm313, %v1296
  %1306 = vrot.lane.b32.xlu0 %v857, 64
  %v1307 = vpop.permute.xlu0 %1306
  %1308 = vrot.lane.b32.xlu0 %v860, 64
  %v1309 = vpop.permute.xlu0 %1308
  %1310 = vrot.lane.b32.xlu0 %v865, 64
  %v1311 = vpop.permute.xlu0 %1310
  %1315 = vst.msk [vmem:[#allocation3] sm:$0xff] %vm324, %v1307
  %1316 = vst.msk [vmem:[#allocation3 + $0x8] sm:$0xff] %vm324, %v1309
  %1317 = vst.msk [vmem:[#allocation3 + $0x10] sm:$0xff] %vm324, %v1311
  %v1318 = vld [vmem:[#allocation3] sm:$0xff]
  %v1319 = vld [vmem:[#allocation3 + $0x8] sm:$0xff]
  %v1320 = vld [vmem:[#allocation3 + $0x10] sm:$0xff]
  %v1321 = vpack.c.bf16 %v1319, %v1318
  %v1322 = vpack.c.bf16 %v1320, %v1320
  %v1324 = vlaneseq
  %v1325 = vshrl.u32 %v1324, 7
  %v1326 = vsub.s32 0, %v1325
  %v1327 = vrot.slane %v1142, %v1326
  %v1339 = vunpack.c.l.b16 %v1131
  %v1340 = vunpack.c.l.b16 %v1132
  %v1341 = vunpack.c.l.b16 %v1133
  %v1342 = vunpack.c.l.b16 %v1134
  %v1343 = vunpack.c.l.b16 %v1135
  %v1344 = vunpack.c.l.b16 %v1136
  %v1345 = vunpack.c.l.b16 %v1137
  %v1346 = vunpack.c.l.b16 %v1138
  %v1347 = vunpack.c.l.b16 %v1139
  %v1348 = vunpack.c.l.b16 %v1140
  %v1349 = vpack.c.b16 %v1340, %v1339
  %v1350 = vpack.c.b16 %v1342, %v1341
  %v1351 = vpack.c.b16 %v1344, %v1343
  %v1352 = vpack.c.b16 %v1346, %v1345
  %v1353 = vpack.c.b16 %v1348, %v1347
  %v1360 = vsel %vm366, %v1321, 0
  %v1363 = vsel %vm366, %v1322, 0
  %1365 = vmatprep.subr.bf16.mxu0 0
  %1366 = vmatpush1.bf16.msra.mxu0 %v1349
  %1367 = vmatprep.subr.bf16.mxu0 0
  %1368 = vmatpush1.bf16.msra.mxu0 %v1350
  %1369 = vmatprep.subr.bf16.mxu0 0
  %1370 = vmatpush1.bf16.msra.mxu0 %v1351
  %1371 = vmatprep.subr.bf16.mxu0 0
  %1372 = vmatpush1.bf16.msra.mxu0 %v1352
  %1373 = vmatprep.subr.bf16.mxu0 0
  %1374 = vmatpush1.bf16.msra.mxu0 %v1353
  %1375 = vmatprep.subr.bf16.mxu0 0
  %1376 = vmatpush1.bf16.msra.mxu0 0
  %1377 = vmatprep.subr.bf16.mxu0 0
  %1378 = vmatpush1.bf16.msra.mxu0 0
  %1379 = vmatprep.subr.bf16.mxu0 0
  %1380 = vmatpush1.bf16.msra.mxu0 0
  %1381 = vmatprep.subr.bf16.mxu0 0
  %1382 = vmatpush1.bf16.msra.mxu0 0
  %1383 = vmatprep.subr.bf16.mxu0 0
  %1384 = vmatpush1.bf16.msra.mxu0 0
  %1385 = vmatprep.subr.bf16.mxu0 0
  %1386 = vmatpush1.bf16.msra.mxu0 0
  %1387 = vmatprep.subr.bf16.mxu0 0
  %1388 = vmatpush1.bf16.msra.mxu0 0
  %1389 = vmatprep.subr.bf16.mxu0 0
  %1390 = vmatpush1.bf16.msra.mxu0 0
  %1391 = vmatprep.subr.bf16.mxu0 0
  %1392 = vmatpush1.bf16.msra.mxu0 0
  %1393 = vmatprep.subr.bf16.mxu0 0
  %1394 = vmatpush1.bf16.msra.mxu0 0
  %1395 = vmatprep.subr.bf16.mxu0 0
  %1396 = vmatpush1.bf16.msra.mxu0 0
  %1397 = vmatprep.mubr.bf16.mxu0 0
  %1398 = vmatmul.mubr.bf16.gmra.mrb[0].mxu0 %v1360
  %v1399 = vpop.f32.mrb[0].mxu0
  %v1400 = vadd.f32 %v1327, %v1399
  %v1401 = vpop.f32.mrb[0].mxu0
  %v1402 = vpop.f32.mrb[0].mxu0
  %v1403 = vadd.f32 %v1327, %v1402
  %v1404 = vpop.f32.mrb[0].mxu0
  %1405 = vmatprep.mubr.bf16.mxu0 0
  %1406 = vmatmul.mubr.bf16.gmra.mrb[0].mxu0 %v1363
  %v1407 = vpop.f32.mrb[0].mxu0
  %v1408 = vadd.f32 %v1327, %v1407
  %v1409 = vpop.f32.mrb[0].mxu0
  %v1410 = vpop.f32.mrb[0].mxu0
  %v1411 = vpop.f32.mrb[0].mxu0
  %1412 = vdwg.mxu0
  %v1413 = vmax.f32 %v1400, 0.0
  %v1414 = vmax.f32 %v1403, 0.0
  %v1415 = vmax.f32 %v1408, 0.0
  %v1416 = vsel %vm65, %v1400, %v1413
  %v1417 = vsel %vm65, %v1403, %v1414
  %v1418 = vsel %vm65, %v1408, %v1415
  %v1419 = vsel %vm46, %v1416, 0.0
  %v1420 = vsel %vm46, %v1417, 0.0
  %v1421 = vadd.f32 %v1419, %v1420
  %v1422 = vsel %vm46, %v1418, 0.0
  %v1423 = vadd.f32 %v1421, %v1422
  %v1424 = vrot.slane %v1423, 4
  %v1425 = vadd.f32 %v1423, %v1424
  %v1426 = vrot.slane %v1425, 2
  %v1427 = vadd.f32 %v1425, %v1426
  %v1428 = vrot.slane %v1427, 1
  %v1429 = vadd.f32 %v1427, %v1428
  %v1430 = vmul.f32 %v1429, %v750
  %v1431 = vsub.f32 %v1416, %v1430
  %v1432 = vsub.f32 %v1417, %v1430
  %v1433 = vsub.f32 %v1418, %v1430
  %v1434 = vmul.f32 %v1431, %v1431
  %v1435 = vmul.f32 %v1432, %v1432
  %v1436 = vmul.f32 %v1433, %v1433
  %v1437 = vsel %vm46, %v1434, 0.0
  %v1438 = vsel %vm46, %v1435, 0.0
  %v1439 = vadd.f32 %v1437, %v1438
  %v1440 = vsel %vm46, %v1436, 0.0
  %v1441 = vadd.f32 %v1439, %v1440
  %v1442 = vrot.slane %v1441, 4
  %v1443 = vadd.f32 %v1441, %v1442
  %v1444 = vrot.slane %v1443, 2
  %v1445 = vadd.f32 %v1443, %v1444
  %v1446 = vrot.slane %v1445, 1
  %v1447 = vadd.f32 %v1445, %v1446
  %v1448 = vmul.f32 %v1447, %v750
  %v1449 = vadd.f32 %v1448, 1e-05
  %v1450 = vrsqrt.pop %v1449
  %v1451 = vmul.f32 %v1431, %v1450
  %v1452 = vmul.f32 %v1432, %v1450
  %v1453 = vmul.f32 %v1433, %v1450
  %v1454 = vpack.c.bf16 %v1452, %v1451
  %v1455 = vpack.c.bf16 %v1453, %v1453
  %v1457 = vsel %vm77, %v1455, 0
  %1459 = vmatprep.subr.bf16.mxu0 0
  %1460 = vmatpush1.bf16.msra.mxu0 %v1454
  %1461 = vmatprep.subr.bf16.mxu0 0
  %1462 = vmatpush1.bf16.msra.mxu0 %v1457
  %1463 = vmatprep.subr.bf16.mxu0 0
  %1464 = vmatpush1.bf16.msra.mxu0 0
  %1465 = vmatprep.subr.bf16.mxu0 0
  %1466 = vmatpush1.bf16.msra.mxu0 0
  %1467 = vmatprep.subr.bf16.mxu0 0
  %1468 = vmatpush1.bf16.msra.mxu0 0
  %1469 = vmatprep.subr.bf16.mxu0 0
  %1470 = vmatpush1.bf16.msra.mxu0 0
  %1471 = vmatprep.subr.bf16.mxu0 0
  %1472 = vmatpush1.bf16.msra.mxu0 0
  %1473 = vmatprep.subr.bf16.mxu0 0
  %1474 = vmatpush1.bf16.msra.mxu0 0
  %1475 = vmatprep.subr.bf16.mxu0 0
  %1476 = vmatpush1.bf16.msra.mxu0 0
  %1477 = vmatprep.subr.bf16.mxu0 0
  %1478 = vmatpush1.bf16.msra.mxu0 0
  %1479 = vmatprep.subr.bf16.mxu0 0
  %1480 = vmatpush1.bf16.msra.mxu0 0
  %1481 = vmatprep.subr.bf16.mxu0 0
  %1482 = vmatpush1.bf16.msra.mxu0 0
  %1483 = vmatprep.subr.bf16.mxu0 0
  %1484 = vmatpush1.bf16.msra.mxu0 0
  %1485 = vmatprep.subr.bf16.mxu0 0
  %1486 = vmatpush1.bf16.msra.mxu0 0
  %1487 = vmatprep.subr.bf16.mxu0 0
  %1488 = vmatpush1.bf16.msra.mxu0 0
  %1489 = vmatprep.subr.bf16.mxu0 0
  %1490 = vmatpush1.bf16.msra.mxu0 0
  %1491 = vmatprep.mubr.bf16.mxu0 0
  %1492 = vmatmul.mubr.bf16.gmra.mrb[0].mxu0 %v75
  %v1493 = vpop.f32.mrb[0].mxu0
  %v1494 = vadd.f32 0.0, %v1493
  %v1495 = vpop.f32.mrb[0].mxu0
  %v1496 = vpop.f32.mrb[0].mxu0
  %v1497 = vadd.f32 0.0, %v1496
  %v1498 = vpop.f32.mrb[0].mxu0
  %1499 = vdwg.mxu0
  %v1500 = vpack.c.bf16 %v1129, %v1128
  %1501 = vmatprep.subr.bf16.mxu0 0
  %1502 = vmatpush1.bf16.msra.mxu0 %v1500
  %1503 = vmatprep.subr.bf16.mxu0 0
  %1504 = vmatpush1.bf16.msra.mxu0 0
  %1505 = vmatprep.subr.bf16.mxu0 0
  %1506 = vmatpush1.bf16.msra.mxu0 0
  %1507 = vmatprep.subr.bf16.mxu0 0
  %1508 = vmatpush1.bf16.msra.mxu0 0
  %1509 = vmatprep.subr.bf16.mxu0 0
  %1510 = vmatpush1.bf16.msra.mxu0 0
  %1511 = vmatprep.subr.bf16.mxu0 0
  %1512 = vmatpush1.bf16.msra.mxu0 0
  %1513 = vmatprep.subr.bf16.mxu0 0
  %1514 = vmatpush1.bf16.msra.mxu0 0
  %1515 = vmatprep.subr.bf16.mxu0 0
  %1516 = vmatpush1.bf16.msra.mxu0 0
  %1517 = vmatprep.subr.bf16.mxu0 0
  %1518 = vmatpush1.bf16.msra.mxu0 0
  %1519 = vmatprep.subr.bf16.mxu0 0
  %1520 = vmatpush1.bf16.msra.mxu0 0
  %1521 = vmatprep.subr.bf16.mxu0 0
  %1522 = vmatpush1.bf16.msra.mxu0 0
  %1523 = vmatprep.subr.bf16.mxu0 0
  %1524 = vmatpush1.bf16.msra.mxu0 0
  %1525 = vmatprep.subr.bf16.mxu0 0
  %1526 = vmatpush1.bf16.msra.mxu0 0
  %1527 = vmatprep.subr.bf16.mxu0 0
  %1528 = vmatpush1.bf16.msra.mxu0 0
  %1529 = vmatprep.subr.bf16.mxu0 0
  %1530 = vmatpush1.bf16.msra.mxu0 0
  %1531 = vmatprep.subr.bf16.mxu0 0
  %1532 = vmatpush1.bf16.msra.mxu0 0
  %1533 = vmatprep.mubr.bf16.mxu0 0
  %1534 = vmatmul.mubr.bf16.gmra.mrb[0].mxu0 %v124
  %v1535 = vpop.f32.mrb[0].mxu0
  %v1536 = vadd.f32 0.0, %v1535
  %v1537 = vpop.f32.mrb[0].mxu0
  %v1538 = vpop.f32.mrb[0].mxu0
  %v1539 = vadd.f32 0.0, %v1538
  %v1540 = vpop.f32.mrb[0].mxu0
  %1541 = vmatprep.mubr.bf16.mxu0 0
  %1542 = vmatmul.mubr.bf16.gmra.mrb[0].mxu0 %v127
  %v1543 = vpop.f32.mrb[0].mxu0
  %v1544 = vadd.f32 0.0, %v1543
  %v1545 = vpop.f32.mrb[0].mxu0
  %v1546 = vpop.f32.mrb[0].mxu0
  %v1547 = vpop.f32.mrb[0].mxu0
  %1548 = vdwg.mxu0
  %s1549 = scalar_lea.vmem %s4, 160
  %v1550 = vld [vmem:[%s1549] sm:$0xf]
  %v1551 = vld [vmem:[%s1549 + $0x4] sm:$0xf]
  %v1552 = vld [vmem:[%s1549 + $0x8] sm:$0xf]
  %v1553 = vld [vmem:[%s1549 + $0xc] sm:$0xf]
  %v1554 = vld [vmem:[%s1549 + $0x10] sm:$0xf]
  %v1555 = vld [vmem:[%s1549 + $0x14] sm:$0xf]
  %v1556 = vld [vmem:[%s1549 + $0x18] sm:$0xf]
  %v1557 = vld [vmem:[%s1549 + $0x1c] sm:$0xf]
  %v1558 = vld [vmem:[%s1549 + $0x20] sm:$0xf]
  %v1559 = vld [vmem:[%s1549 + $0x24] sm:$0xf]
  %s1560 = scalar_lea.vmem %s5, 4
  %v1561 = vld [vmem:[%s1560] sm:$0x1]
  %1562 = vst.msk [vmem:[#allocation2] sm:$0xff] %vm46, %v1128
  %1563 = vst.msk [vmem:[#allocation2 + $0x8] sm:$0xff] %vm46, %v1129
  %v1564 = vmul.f32 %v49, %v1128
  %v1565 = vmul.f32 %v52, %v1129
  %1568 = vrot.lane.b32.xlu0 %v1564, 16
  %v1569 = vpop.permute.xlu0 %1568
  %1570 = vrot.lane.b32.xlu0 %v1565, 16
  %v1571 = vpop.permute.xlu0 %1570
  %1574 = vst.msk [vmem:[#allocation2] sm:$0xff] %vm200, %v1569
  %1575 = vst.msk [vmem:[#allocation2 + $0x8] sm:$0xff] %vm200, %v1571
  %1576 = vmatprep.subr.bf16.mxu0 0
  %1577 = vmatpush1.bf16.msra.mxu0 %v1500
  %1578 = vmatprep.subr.bf16.mxu0 0
  %1579 = vmatpush1.bf16.msra.mxu0 0
  %1580 = vmatprep.subr.bf16.mxu0 0
  %1581 = vmatpush1.bf16.msra.mxu0 0
  %1582 = vmatprep.subr.bf16.mxu0 0
  %1583 = vmatpush1.bf16.msra.mxu0 0
  %1584 = vmatprep.subr.bf16.mxu0 0
  %1585 = vmatpush1.bf16.msra.mxu0 0
  %1586 = vmatprep.subr.bf16.mxu0 0
  %1587 = vmatpush1.bf16.msra.mxu0 0
  %1588 = vmatprep.subr.bf16.mxu0 0
  %1589 = vmatpush1.bf16.msra.mxu0 0
  %1590 = vmatprep.subr.bf16.mxu0 0
  %1591 = vmatpush1.bf16.msra.mxu0 0
  %1592 = vmatprep.subr.bf16.mxu0 0
  %1593 = vmatpush1.bf16.msra.mxu0 0
  %1594 = vmatprep.subr.bf16.mxu0 0
  %1595 = vmatpush1.bf16.msra.mxu0 0
  %1596 = vmatprep.subr.bf16.mxu0 0
  %1597 = vmatpush1.bf16.msra.mxu0 0
  %1598 = vmatprep.subr.bf16.mxu0 0
  %1599 = vmatpush1.bf16.msra.mxu0 0
  %1600 = vmatprep.subr.bf16.mxu0 0
  %1601 = vmatpush1.bf16.msra.mxu0 0
  %1602 = vmatprep.subr.bf16.mxu0 0
  %1603 = vmatpush1.bf16.msra.mxu0 0
  %1604 = vmatprep.subr.bf16.mxu0 0
  %1605 = vmatpush1.bf16.msra.mxu0 0
  %1606 = vmatprep.subr.bf16.mxu0 0
  %1607 = vmatpush1.bf16.msra.mxu0 0
  %1608 = vmatprep.mubr.bf16.mxu0 0
  %1609 = vmatmul.mubr.bf16.gmra.mrb[0].mxu0 %v204
  %v1610 = vpop.f32.mrb[0].mxu0
  %v1611 = vadd.f32 0.0, %v1610
  %v1612 = vpop.f32.mrb[0].mxu0
  %v1613 = vpop.f32.mrb[0].mxu0
  %v1614 = vadd.f32 0.0, %v1613
  %v1615 = vpop.f32.mrb[0].mxu0
  %1616 = vdwg.mxu0
  %v1617 = vpack.c.bf16 %v1614, %v1611
  %v1618 = vunpack.c.l.bf16 %v1617
  %v1619 = vunpack.c.h.bf16 %v1617
  %1622 = vrot.lane.b32.xlu0 %v1618, 32
  %v1623 = vpop.permute.xlu0 %1622
  %1624 = vrot.lane.b32.xlu0 %v1619, 32
  %v1625 = vpop.permute.xlu0 %1624
  %1628 = vst.msk [vmem:[#allocation2] sm:$0xff] %vm258, %v1623
  %1629 = vst.msk [vmem:[#allocation2 + $0x8] sm:$0xff] %vm258, %v1625
  %1630 = vmatprep.subr.bf16.mxu0 0
  %1631 = vmatpush1.bf16.msra.mxu0 %v1617
  %1632 = vmatprep.subr.bf16.mxu0 0
  %1633 = vmatpush1.bf16.msra.mxu0 0
  %1634 = vmatprep.subr.bf16.mxu0 0
  %1635 = vmatpush1.bf16.msra.mxu0 0
  %1636 = vmatprep.subr.bf16.mxu0 0
  %1637 = vmatpush1.bf16.msra.mxu0 0
  %1638 = vmatprep.subr.bf16.mxu0 0
  %1639 = vmatpush1.bf16.msra.mxu0 0
  %1640 = vmatprep.subr.bf16.mxu0 0
  %1641 = vmatpush1.bf16.msra.mxu0 0
  %1642 = vmatprep.subr.bf16.mxu0 0
  %1643 = vmatpush1.bf16.msra.mxu0 0
  %1644 = vmatprep.subr.bf16.mxu0 0
  %1645 = vmatpush1.bf16.msra.mxu0 0
  %1646 = vmatprep.subr.bf16.mxu0 0
  %1647 = vmatpush1.bf16.msra.mxu0 0
  %1648 = vmatprep.subr.bf16.mxu0 0
  %1649 = vmatpush1.bf16.msra.mxu0 0
  %1650 = vmatprep.subr.bf16.mxu0 0
  %1651 = vmatpush1.bf16.msra.mxu0 0
  %1652 = vmatprep.subr.bf16.mxu0 0
  %1653 = vmatpush1.bf16.msra.mxu0 0
  %1654 = vmatprep.subr.bf16.mxu0 0
  %1655 = vmatpush1.bf16.msra.mxu0 0
  %1656 = vmatprep.subr.bf16.mxu0 0
  %1657 = vmatpush1.bf16.msra.mxu0 0
  %1658 = vmatprep.subr.bf16.mxu0 0
  %1659 = vmatpush1.bf16.msra.mxu0 0
  %1660 = vmatprep.subr.bf16.mxu0 0
  %1661 = vmatpush1.bf16.msra.mxu0 0
  %1662 = vmatprep.mubr.bf16.mxu0 0
  %1663 = vmatmul.mubr.bf16.gmra.mrb[0].mxu0 %v204
  %v1664 = vpop.f32.mrb[0].mxu0
  %v1665 = vadd.f32 0.0, %v1664
  %v1666 = vpop.f32.mrb[0].mxu0
  %v1667 = vpop.f32.mrb[0].mxu0
  %v1668 = vadd.f32 0.0, %v1667
  %v1669 = vpop.f32.mrb[0].mxu0
  %1670 = vdwg.mxu0
  %v1671 = vpack.c.bf16 %v1668, %v1665
  %v1672 = vunpack.c.l.bf16 %v1671
  %v1673 = vunpack.c.h.bf16 %v1671
  %1676 = vrot.lane.b32.xlu0 %v1672, 48
  %v1677 = vpop.permute.xlu0 %1676
  %1678 = vrot.lane.b32.xlu0 %v1673, 48
  %v1679 = vpop.permute.xlu0 %1678
  %1682 = vst.msk [vmem:[#allocation2] sm:$0xff] %vm313, %v1677
  %1683 = vst.msk [vmem:[#allocation2 + $0x8] sm:$0xff] %vm313, %v1679
  %1686 = vrot.lane.b32.xlu0 %v1494, 64
  %v1687 = vpop.permute.xlu0 %1686
  %1688 = vrot.lane.b32.xlu0 %v1497, 64
  %v1689 = vpop.permute.xlu0 %1688
  %1692 = vst.msk [vmem:[#allocation2] sm:$0xff] %vm324, %v1687
  %1693 = vst.msk [vmem:[#allocation2 + $0x8] sm:$0xff] %vm324, %v1689
  %v1694 = vld [vmem:[#allocation2] sm:$0xff]
  %v1695 = vld [vmem:[#allocation2 + $0x8] sm:$0xff]
  %v1696 = vpack.c.bf16 %v1695, %v1694
  %v1698 = vlaneseq
  %v1699 = vshrl.u32 %v1698, 7
  %v1700 = vsub.s32 0, %v1699
  %v1701 = vrot.slane %v1561, %v1700
  %v1713 = vunpack.c.l.b16 %v1550
  %v1714 = vunpack.c.l.b16 %v1551
  %v1715 = vunpack.c.l.b16 %v1552
  %v1716 = vunpack.c.l.b16 %v1553
  %v1717 = vunpack.c.l.b16 %v1554
  %v1718 = vunpack.c.l.b16 %v1555
  %v1719 = vunpack.c.l.b16 %v1556
  %v1720 = vunpack.c.l.b16 %v1557
  %v1721 = vunpack.c.l.b16 %v1558
  %v1722 = vunpack.c.l.b16 %v1559
  %v1723 = vpack.c.b16 %v1714, %v1713
  %v1724 = vpack.c.b16 %v1716, %v1715
  %v1725 = vpack.c.b16 %v1718, %v1717
  %v1726 = vpack.c.b16 %v1720, %v1719
  %v1727 = vpack.c.b16 %v1722, %v1721
  %v1734 = vsel %vm366, %v1696, 0
  %1736 = vmatprep.subr.bf16.mxu0 0
  %1737 = vmatpush1.bf16.msra.mxu0 %v1723
  %1738 = vmatprep.subr.bf16.mxu0 0
  %1739 = vmatpush1.bf16.msra.mxu0 %v1724
  %1740 = vmatprep.subr.bf16.mxu0 0
  %1741 = vmatpush1.bf16.msra.mxu0 %v1725
  %1742 = vmatprep.subr.bf16.mxu0 0
  %1743 = vmatpush1.bf16.msra.mxu0 %v1726
  %1744 = vmatprep.subr.bf16.mxu0 0
  %1745 = vmatpush1.bf16.msra.mxu0 %v1727
  %1746 = vmatprep.subr.bf16.mxu0 0
  %1747 = vmatpush1.bf16.msra.mxu0 0
  %1748 = vmatprep.subr.bf16.mxu0 0
  %1749 = vmatpush1.bf16.msra.mxu0 0
  %1750 = vmatprep.subr.bf16.mxu0 0
  %1751 = vmatpush1.bf16.msra.mxu0 0
  %1752 = vmatprep.subr.bf16.mxu0 0
  %1753 = vmatpush1.bf16.msra.mxu0 0
  %1754 = vmatprep.subr.bf16.mxu0 0
  %1755 = vmatpush1.bf16.msra.mxu0 0
  %1756 = vmatprep.subr.bf16.mxu0 0
  %1757 = vmatpush1.bf16.msra.mxu0 0
  %1758 = vmatprep.subr.bf16.mxu0 0
  %1759 = vmatpush1.bf16.msra.mxu0 0
  %1760 = vmatprep.subr.bf16.mxu0 0
  %1761 = vmatpush1.bf16.msra.mxu0 0
  %1762 = vmatprep.subr.bf16.mxu0 0
  %1763 = vmatpush1.bf16.msra.mxu0 0
  %1764 = vmatprep.subr.bf16.mxu0 0
  %1765 = vmatpush1.bf16.msra.mxu0 0
  %1766 = vmatprep.subr.bf16.mxu0 0
  %1767 = vmatpush1.bf16.msra.mxu0 0
  %1768 = vmatprep.mubr.bf16.mxu0 0
  %1769 = vmatmul.mubr.bf16.gmra.mrb[0].mxu0 %v1734
  %v1770 = vpop.f32.mrb[0].mxu0
  %v1771 = vadd.f32 %v1701, %v1770
  %v1772 = vpop.f32.mrb[0].mxu0
  %v1773 = vpop.f32.mrb[0].mxu0
  %v1774 = vadd.f32 %v1701, %v1773
  %v1775 = vpop.f32.mrb[0].mxu0
  %1776 = vdwg.mxu0
  %v1777 = vmax.f32 %v1771, 0.0
  %v1778 = vmax.f32 %v1774, 0.0
  %v1779 = vsel %vm65, %v1771, %v1777
  %v1780 = vsel %vm65, %v1774, %v1778
  %v1781 = vsel %vm46, %v1779, 0.0
  %v1782 = vsel %vm46, %v1780, 0.0
  %v1783 = vadd.f32 %v1781, %v1782
  %v1784 = vrot.slane %v1783, 4
  %v1785 = vadd.f32 %v1783, %v1784
  %v1786 = vrot.slane %v1785, 2
  %v1787 = vadd.f32 %v1785, %v1786
  %v1788 = vrot.slane %v1787, 1
  %v1789 = vadd.f32 %v1787, %v1788
  %v1790 = vmul.f32 %v1789, %v424
  %v1791 = vsub.f32 %v1779, %v1790
  %v1792 = vsub.f32 %v1780, %v1790
  %v1793 = vmul.f32 %v1791, %v1791
  %v1794 = vmul.f32 %v1792, %v1792
  %v1795 = vsel %vm46, %v1793, 0.0
  %v1796 = vsel %vm46, %v1794, 0.0
  %v1797 = vadd.f32 %v1795, %v1796
  %v1798 = vrot.slane %v1797, 4
  %v1799 = vadd.f32 %v1797, %v1798
  %v1800 = vrot.slane %v1799, 2
  %v1801 = vadd.f32 %v1799, %v1800
  %v1802 = vrot.slane %v1801, 1
  %v1803 = vadd.f32 %v1801, %v1802
  %v1804 = vmul.f32 %v1803, %v424
  %v1805 = vadd.f32 %v1804, 1e-05
  %v1806 = vrsqrt.pop %v1805
  %v1807 = vmul.f32 %v1791, %v1806
  %v1808 = vmul.f32 %v1792, %v1806
  %1809 = vst.msk [vmem:[#allocation3] sm:$0xff] %vm46, %v1451
  %1810 = vst.msk [vmem:[#allocation3 + $0x8] sm:$0xff] %vm46, %v1452
  %1811 = vst.msk [vmem:[#allocation3 + $0x10] sm:$0xff] %vm46, %v1453
  %v1812 = vmul.f32 %v56, %v1451
  %v1813 = vmul.f32 %v59, %v1452
  %v1814 = vmul.f32 %v62, %v1453
  %1818 = vrot.lane.b32.xlu0 %v1812, 16
  %v1819 = vpop.permute.xlu0 %1818
  %1820 = vrot.lane.b32.xlu0 %v1813, 16
  %v1821 = vpop.permute.xlu0 %1820
  %1822 = vrot.lane.b32.xlu0 %v1814, 16
  %v1823 = vpop.permute.xlu0 %1822
  %1827 = vst.msk [vmem:[#allocation3] sm:$0xff] %vm200, %v1819
  %1828 = vst.msk [vmem:[#allocation3 + $0x8] sm:$0xff] %vm200, %v1821
  %1829 = vst.msk [vmem:[#allocation3 + $0x10] sm:$0xff] %vm200, %v1823
  %1830 = vmatprep.subr.bf16.mxu0 0
  %1831 = vmatpush1.bf16.msra.mxu0 %v1454
  %1832 = vmatprep.subr.bf16.mxu0 0
  %1833 = vmatpush1.bf16.msra.mxu0 %v1457
  %1834 = vmatprep.subr.bf16.mxu0 0
  %1835 = vmatpush1.bf16.msra.mxu0 0
  %1836 = vmatprep.subr.bf16.mxu0 0
  %1837 = vmatpush1.bf16.msra.mxu0 0
  %1838 = vmatprep.subr.bf16.mxu0 0
  %1839 = vmatpush1.bf16.msra.mxu0 0
  %1840 = vmatprep.subr.bf16.mxu0 0
  %1841 = vmatpush1.bf16.msra.mxu0 0
  %1842 = vmatprep.subr.bf16.mxu0 0
  %1843 = vmatpush1.bf16.msra.mxu0 0
  %1844 = vmatprep.subr.bf16.mxu0 0
  %1845 = vmatpush1.bf16.msra.mxu0 0
  %1846 = vmatprep.subr.bf16.mxu0 0
  %1847 = vmatpush1.bf16.msra.mxu0 0
  %1848 = vmatprep.subr.bf16.mxu0 0
  %1849 = vmatpush1.bf16.msra.mxu0 0
  %1850 = vmatprep.subr.bf16.mxu0 0
  %1851 = vmatpush1.bf16.msra.mxu0 0
  %1852 = vmatprep.subr.bf16.mxu0 0
  %1853 = vmatpush1.bf16.msra.mxu0 0
  %1854 = vmatprep.subr.bf16.mxu0 0
  %1855 = vmatpush1.bf16.msra.mxu0 0
  %1856 = vmatprep.subr.bf16.mxu0 0
  %1857 = vmatpush1.bf16.msra.mxu0 0
  %1858 = vmatprep.subr.bf16.mxu0 0
  %1859 = vmatpush1.bf16.msra.mxu0 0
  %1860 = vmatprep.subr.bf16.mxu0 0
  %1861 = vmatpush1.bf16.msra.mxu0 0
  %1862 = vmatprep.mubr.bf16.mxu0 0
  %1863 = vmatmul.mubr.bf16.gmra.mrb[0].mxu0 %v479
  %v1864 = vpop.f32.mrb[0].mxu0
  %v1865 = vadd.f32 0.0, %v1864
  %v1866 = vpop.f32.mrb[0].mxu0
  %v1867 = vpop.f32.mrb[0].mxu0
  %v1868 = vadd.f32 0.0, %v1867
  %v1869 = vpop.f32.mrb[0].mxu0
  %1870 = vmatprep.mubr.bf16.mxu0 0
  %1871 = vmatmul.mubr.bf16.gmra.mrb[0].mxu0 %v482
  %v1872 = vpop.f32.mrb[0].mxu0
  %v1873 = vadd.f32 0.0, %v1872
  %v1874 = vpop.f32.mrb[0].mxu0
  %v1875 = vpop.f32.mrb[0].mxu0
  %v1876 = vpop.f32.mrb[0].mxu0
  %1877 = vdwg.mxu0
  %v1878 = vpack.c.bf16 %v1868, %v1865
  %v1879 = vpack.c.bf16 %v1873, %v1873
  %v1880 = vunpack.c.l.bf16 %v1878
  %v1881 = vunpack.c.h.bf16 %v1878
  %v1882 = vunpack.c.l.bf16 %v1879
  %1886 = vrot.lane.b32.xlu0 %v1880, 32
  %v1887 = vpop.permute.xlu0 %1886
  %1888 = vrot.lane.b32.xlu0 %v1881, 32
  %v1889 = vpop.permute.xlu0 %1888
  %1890 = vrot.lane.b32.xlu0 %v1882, 32
  %v1891 = vpop.permute.xlu0 %1890
  %1895 = vst.msk [vmem:[#allocation3] sm:$0xff] %vm258, %v1887
  %1896 = vst.msk [vmem:[#allocation3 + $0x8] sm:$0xff] %vm258, %v1889
  %1897 = vst.msk [vmem:[#allocation3 + $0x10] sm:$0xff] %vm258, %v1891
  %v1899 = vsel %vm77, %v1879, 0
  %1901 = vmatprep.subr.bf16.mxu0 0
  %1902 = vmatpush1.bf16.msra.mxu0 %v1878
  %1903 = vmatprep.subr.bf16.mxu0 0
  %1904 = vmatpush1.bf16.msra.mxu0 %v1899
  %1905 = vmatprep.subr.bf16.mxu0 0
  %1906 = vmatpush1.bf16.msra.mxu0 0
  %1907 = vmatprep.subr.bf16.mxu0 0
  %1908 = vmatpush1.bf16.msra.mxu0 0
  %1909 = vmatprep.subr.bf16.mxu0 0
  %1910 = vmatpush1.bf16.msra.mxu0 0
  %1911 = vmatprep.subr.bf16.mxu0 0
  %1912 = vmatpush1.bf16.msra.mxu0 0
  %1913 = vmatprep.subr.bf16.mxu0 0
  %1914 = vmatpush1.bf16.msra.mxu0 0
  %1915 = vmatprep.subr.bf16.mxu0 0
  %1916 = vmatpush1.bf16.msra.mxu0 0
  %1917 = vmatprep.subr.bf16.mxu0 0
  %1918 = vmatpush1.bf16.msra.mxu0 0
  %1919 = vmatprep.subr.bf16.mxu0 0
  %1920 = vmatpush1.bf16.msra.mxu0 0
  %1921 = vmatprep.subr.bf16.mxu0 0
  %1922 = vmatpush1.bf16.msra.mxu0 0
  %1923 = vmatprep.subr.bf16.mxu0 0
  %1924 = vmatpush1.bf16.msra.mxu0 0
  %1925 = vmatprep.subr.bf16.mxu0 0
  %1926 = vmatpush1.bf16.msra.mxu0 0
  %1927 = vmatprep.subr.bf16.mxu0 0
  %1928 = vmatpush1.bf16.msra.mxu0 0
  %1929 = vmatprep.subr.bf16.mxu0 0
  %1930 = vmatpush1.bf16.msra.mxu0 0
  %1931 = vmatprep.subr.bf16.mxu0 0
  %1932 = vmatpush1.bf16.msra.mxu0 0
  %1933 = vmatprep.mubr.bf16.mxu0 0
  %1934 = vmatmul.mubr.bf16.gmra.mrb[0].mxu0 %v479
  %v1935 = vpop.f32.mrb[0].mxu0
  %v1936 = vadd.f32 0.0, %v1935
  %v1937 = vpop.f32.mrb[0].mxu0
  %v1938 = vpop.f32.mrb[0].mxu0
  %v1939 = vadd.f32 0.0, %v1938
  %v1940 = vpop.f32.mrb[0].mxu0
  %1941 = vmatprep.mubr.bf16.mxu0 0
  %1942 = vmatmul.mubr.bf16.gmra.mrb[0].mxu0 %v482
  %v1943 = vpop.f32.mrb[0].mxu0
  %v1944 = vadd.f32 0.0, %v1943
  %v1945 = vpop.f32.mrb[0].mxu0
  %v1946 = vpop.f32.mrb[0].mxu0
  %v1947 = vpop.f32.mrb[0].mxu0
  %1948 = vdwg.mxu0
  %v1949 = vpack.c.bf16 %v1939, %v1936
  %v1950 = vpack.c.bf16 %v1944, %v1944
  %v1951 = vunpack.c.l.bf16 %v1949
  %v1952 = vunpack.c.h.bf16 %v1949
  %v1953 = vunpack.c.l.bf16 %v1950
  %1957 = vrot.lane.b32.xlu0 %v1951, 48
  %v1958 = vpop.permute.xlu0 %1957
  %1959 = vrot.lane.b32.xlu0 %v1952, 48
  %v1960 = vpop.permute.xlu0 %1959
  %1961 = vrot.lane.b32.xlu0 %v1953, 48
  %v1962 = vpop.permute.xlu0 %1961
  %1966 = vst.msk [vmem:[#allocation3] sm:$0xff] %vm313, %v1958
  %1967 = vst.msk [vmem:[#allocation3 + $0x8] sm:$0xff] %vm313, %v1960
  %1968 = vst.msk [vmem:[#allocation3 + $0x10] sm:$0xff] %vm313, %v1962
  %1972 = vrot.lane.b32.xlu0 %v1536, 64
  %v1973 = vpop.permute.xlu0 %1972
  %1974 = vrot.lane.b32.xlu0 %v1539, 64
  %v1975 = vpop.permute.xlu0 %1974
  %1976 = vrot.lane.b32.xlu0 %v1544, 64
  %v1977 = vpop.permute.xlu0 %1976
  %1981 = vst.msk [vmem:[#allocation3] sm:$0xff] %vm324, %v1973
  %1982 = vst.msk [vmem:[#allocation3 + $0x8] sm:$0xff] %vm324, %v1975
  %1983 = vst.msk [vmem:[#allocation3 + $0x10] sm:$0xff] %vm324, %v1977
  %v1984 = vpack.c.bf16 %v1808, %v1807
  %v1985 = vld [vmem:[%s6] sm:$0xf]
  %v1986 = vld [vmem:[%s6 + $0x4] sm:$0xf]
  %v1987 = vld [vmem:[%s7] sm:$0x1]
  %v1989 = vlaneseq
  %v1990 = vshrl.u32 %v1989, 7
  %v1991 = vsub.s32 0, %v1990
  %v1992 = vrot.slane %v1987, %v1991
  %v1996 = vunpack.c.l.b16 %v1985
  %v1997 = vunpack.c.l.b16 %v1986
  %v1998 = vpack.c.b16 %v1997, %v1996
  %v2001 = vsel %vm46, %v1984, 0
  %2003 = vmatprep.subr.bf16.mxu0 0
  %2004 = vmatpush1.bf16.msra.mxu0 %v1998
  %2005 = vmatprep.subr.bf16.mxu0 0
  %2006 = vmatpush1.bf16.msra.mxu0 0
  %2007 = vmatprep.subr.bf16.mxu0 0
  %2008 = vmatpush1.bf16.msra.mxu0 0
  %2009 = vmatprep.subr.bf16.mxu0 0
  %2010 = vmatpush1.bf16.msra.mxu0 0
  %2011 = vmatprep.subr.bf16.mxu0 0
  %2012 = vmatpush1.bf16.msra.mxu0 0
  %2013 = vmatprep.subr.bf16.mxu0 0
  %2014 = vmatpush1.bf16.msra.mxu0 0
  %2015 = vmatprep.subr.bf16.mxu0 0
  %2016 = vmatpush1.bf16.msra.mxu0 0
  %2017 = vmatprep.subr.bf16.mxu0 0
  %2018 = vmatpush1.bf16.msra.mxu0 0
  %2019 = vmatprep.subr.bf16.mxu0 0
  %2020 = vmatpush1.bf16.msra.mxu0 0
  %2021 = vmatprep.subr.bf16.mxu0 0
  %2022 = vmatpush1.bf16.msra.mxu0 0
  %2023 = vmatprep.subr.bf16.mxu0 0
  %2024 = vmatpush1.bf16.msra.mxu0 0
  %2025 = vmatprep.subr.bf16.mxu0 0
  %2026 = vmatpush1.bf16.msra.mxu0 0
  %2027 = vmatprep.subr.bf16.mxu0 0
  %2028 = vmatpush1.bf16.msra.mxu0 0
  %2029 = vmatprep.subr.bf16.mxu0 0
  %2030 = vmatpush1.bf16.msra.mxu0 0
  %2031 = vmatprep.subr.bf16.mxu0 0
  %2032 = vmatpush1.bf16.msra.mxu0 0
  %2033 = vmatprep.subr.bf16.mxu0 0
  %2034 = vmatpush1.bf16.msra.mxu0 0
  %2035 = vmatprep.mubr.bf16.mxu0 0
  %2036 = vmatmul.mubr.bf16.gmra.mrb[0].mxu0 %v2001
  %v2037 = vpop.f32.mrb[0].mxu0
  %v2038 = vadd.f32 %v1992, %v2037
  %v2039 = vpop.f32.mrb[0].mxu0
  %v2040 = vpop.f32.mrb[0].mxu0
  %v2041 = vadd.f32 %v1992, %v2040
  %v2042 = vpop.f32.mrb[0].mxu0
  %2043 = vdwg.mxu0
  %vm2044 = vcmask 15360
  %2045 = vst.msk [vmem:[%s8] sm:$0xff] %vm2044, %v2038
  %2046 = vst.msk [vmem:[%s8 + $0x8] sm:$0xff] %vm2044, %v2041
  // Predicated region
  $region34: #{tpu_custom_call.1} parent=0 // pred_check
    _
  $region35: #{tpu_custom_call.1} parent=0 // pred_check_branch
    %2048 = sbr.rel (0) target = $region37
  $region36: #{tpu_custom_call.1} parent=0 // pred_region
    _
  $region37: #{tpu_custom_call.1} parent=0 // pred_fallthru
    _
  // Predicated region
  $region38: #{tpu_custom_call.1} parent=0 // pred_check
    _
  $region39: #{tpu_custom_call.1} parent=0 // pred_check_branch
    %2050 = sbr.rel (0) target = $region41
  $region40: #{tpu_custom_call.1} parent=0 // pred_region
    _
  $region41: #{tpu_custom_call.1} parent=0 // pred_fallthru
    _

</llo_original>
